<compile_context>
chip_gen: v5e
topology: v5e:2x2
jax: 0.10.0
libtpu: 0.0.40
codegen_flags: <defaults>
</compile_context>

<pallas_src>
import functools
import math

import jax
import jax.numpy as jnp
from jax.experimental import pallas as pl
from jax.experimental.pallas import tpu as pltpu


def _round_up(x, m):
    return (x + m - 1) // m * m


def gru_kernel(x2d_ref, wih_ref, whh_ref, bih_ref, bhh_ref, h_ref, xp_ref,
               *, seq_len, t_blk, bp, hp):
    """One grid step == one block of T_BLK timesteps.

    x2d_ref : (T_BLK*Bp, E)  embedded inputs for this time block (time-major, rows = t*Bp + b)
    wih_ref : (E, 3Hp)       input->gate weights, gates (r,z,n) each in its own Hp-wide lane band
    whh_ref : (Hp, 3Hp)      hidden->gate weights (rows >= H are zero)
    bih_ref : (1, 3Hp)       input biases
    bhh_ref : (1, 3Hp)       hidden biases
    h_ref   : (Bp, Hp)       output hidden state; constant block index => used as the carry
    xp_ref  : (T_BLK*Bp, 3Hp) VMEM scratch holding the hoisted input projections for this block
    """
    blk = pl.program_id(0)

    @pl.when(blk == 0)
    def _():
        h_ref[...] = jnp.zeros_like(h_ref)

    # Hoisted input projection for the whole block: one dense matmul off the serial time chain.
    xp_ref[...] = (
        jnp.dot(x2d_ref[...], wih_ref[...], preferred_element_type=jnp.float32)
        + bih_ref[...]
    )

    whh = whh_ref[...]
    bhh = bhh_ref[...]

    def step(i, h):
        t = blk * t_blk + i
        xp = xp_ref[pl.ds(i * bp, bp), :]                       # (Bp, 3Hp)
        gh = jnp.dot(h, whh, preferred_element_type=jnp.float32) + bhh  # single fused gate matmul
        r = jax.nn.sigmoid(xp[:, 0 * hp:1 * hp] + gh[:, 0 * hp:1 * hp])
        z = jax.nn.sigmoid(xp[:, 1 * hp:2 * hp] + gh[:, 1 * hp:2 * hp])
        n = jnp.tanh(xp[:, 2 * hp:3 * hp] + r * gh[:, 2 * hp:3 * hp])
        h_new = (1.0 - z) * n + z * h
        # Mask out time-padding steps (S not a multiple of T_BLK): keep h unchanged.
        return jnp.where(t < seq_len, h_new, h)

    h = jax.lax.fori_loop(0, t_blk, step, h_ref[...], unroll=True)
    h_ref[...] = h


def _pad_gate_cols(w, H, Hp):
    """(rows, 3H) with gates (r,z,n) concatenated -> (rows, 3Hp), gate g at columns [g*Hp, g*Hp+H)."""
    rows = w.shape[0]
    out = jnp.zeros((rows, 3 * Hp), jnp.float32)
    for g in range(3):
        out = out.at[:, g * Hp:g * Hp + H].set(w[:, g * H:(g + 1) * H].astype(jnp.float32))
    return out


def encoder_forward(tokens, params, *, t_blk=16):
    """tokens: (B, S) int32. Returns hidden: (1, B, H) float32 (matches PyTorch GRU hidden)."""
    emb_table = params["embedding"]            # (V, E)
    wih = params["wih"]                        # (E, 3H), gate order (r, z, n)
    whh = params["whh"]                        # (H, 3H)
    bih = params["bih"]                        # (3H,)
    bhh = params["bhh"]                        # (3H,)

    B, S = tokens.shape
    E = emb_table.shape[1]
    H = whh.shape[0]

    Bp = _round_up(B, 8)          # sublane padding
    Hp = _round_up(H, 128)        # lane padding (each gate occupies a full 128-aligned band)
    T_BLK = max(1, min(t_blk, S))
    nblk = pl.cdiv(S, T_BLK)
    S_pad = nblk * T_BLK

    # Zero-padded, gate-banded weights/biases (padded h lanes provably stay zero).
    wih_p = _pad_gate_cols(wih, H, Hp)                                           # (E, 3Hp)
    whh_p = jnp.zeros((Hp, 3 * Hp), jnp.float32).at[:H].set(_pad_gate_cols(whh, H, Hp))
    bih_p = _pad_gate_cols(bih[None, :], H, Hp)                                  # (1, 3Hp)
    bhh_p = _pad_gate_cols(bhh[None, :], H, Hp)                                  # (1, 3Hp)

    # Time-major embedding gather: transpose the token ids, not the activations.
    emb_tm = jnp.take(emb_table, jnp.transpose(tokens), axis=0)                  # (S, B, E)
    emb_pad = jnp.zeros((S_pad, Bp, E), jnp.float32).at[:S, :B].set(
        emb_tm.astype(jnp.float32))
    x2d = emb_pad.reshape(S_pad * Bp, E)                                         # (S_pad*Bp, E)

    kernel = functools.partial(gru_kernel, seq_len=S, t_blk=T_BLK, bp=Bp, hp=Hp)

    h_pad = pl.pallas_call(
        kernel,
        out_shape=jax.ShapeDtypeStruct((Bp, Hp), jnp.float32),
        grid_spec=pltpu.PrefetchScalarGridSpec(
            num_scalar_prefetch=0,
            grid=(nblk,),
            in_specs=[
                pl.BlockSpec((T_BLK * Bp, E), lambda b: (b, 0)),   # marching time-block of inputs
                pl.BlockSpec((E, 3 * Hp), lambda b: (0, 0)),       # resident weights
                pl.BlockSpec((Hp, 3 * Hp), lambda b: (0, 0)),
                pl.BlockSpec((1, 3 * Hp), lambda b: (0, 0)),
                pl.BlockSpec((1, 3 * Hp), lambda b: (0, 0)),
            ],
            out_specs=pl.BlockSpec((Bp, Hp), lambda b: (0, 0)),    # constant block => carry
            scratch_shapes=[pltpu.VMEM((T_BLK * Bp, 3 * Hp), jnp.float32)],
        ),
        compiler_params=pltpu.CompilerParams(
            dimension_semantics=("arbitrary",),   # sequential recurrence over time
        ),
    )(x2d, wih_p, whh_p, bih_p, bhh_p)

    return h_pad[:B, :H][None, :, :]   # (1, B, H)


def init_params(key, vocab_size, embed_size, hidden_size):
    k_emb, k_wih, k_whh, k_bih, k_bhh = jax.random.split(key, 5)
    bound = 1.0 / math.sqrt(hidden_size)
    return {
        # nn.Embedding default init ~ N(0, 1)
        "embedding": jax.random.normal(k_emb, (vocab_size, embed_size), jnp.float32),
        # nn.GRU weights U(-1/sqrt(H), 1/sqrt(H)); stored transposed and gate-concatenated (r,z,n)
        "wih": jax.random.uniform(k_wih, (embed_size, 3 * hidden_size), jnp.float32, -bound, bound),
        "whh": jax.random.uniform(k_whh, (hidden_size, 3 * hidden_size), jnp.float32, -bound, bound),
        "bih": jax.random.uniform(k_bih, (3 * hidden_size,), jnp.float32, -bound, bound),
        "bhh": jax.random.uniform(k_bhh, (3 * hidden_size,), jnp.float32, -bound, bound),
    }


def encoder_forward_ref(tokens, params):
    """Pure-JAX reference of the same PyTorch GRU semantics (for verification)."""
    emb = jnp.take(params["embedding"], tokens, axis=0)   # (B, S, E)
    B = tokens.shape[0]
    H = params["whh"].shape[0]
    wih, whh, bih, bhh = params["wih"], params["whh"], params["bih"], params["bhh"]

    def step(h, x_t):
        gi = x_t @ wih + bih
        gh = h @ whh + bhh
        i_r, i_z, i_n = jnp.split(gi, 3, axis=-1)
        h_r, h_z, h_n = jnp.split(gh, 3, axis=-1)
        r = jax.nn.sigmoid(i_r + h_r)
        z = jax.nn.sigmoid(i_z + h_z)
        n = jnp.tanh(i_n + r * h_n)
        return (1.0 - z) * n + z * h, None

    h0 = jnp.zeros((B, H), jnp.float32)
    h_final, _ = jax.lax.scan(step, h0, jnp.transpose(emb, (1, 0, 2)))
    return h_final[None, :, :]


if __name__ == "__main__":
    # Small shapes consistent with the module's forward: x is (batch, seq) of token ids.
    vocab_size, embed_size, hidden_size = 50, 32, 32
    batch, seq = 2, 8

    key = jax.random.PRNGKey(0)
    k_params, k_tok = jax.random.split(key)
    params = init_params(k_params, vocab_size, embed_size, hidden_size)
    tokens = jax.random.randint(k_tok, (batch, seq), 0, vocab_size, dtype=jnp.int32)

    hidden = jax.block_until_ready(encoder_forward(tokens, params))
    hidden_ref = jax.block_until_ready(encoder_forward_ref(tokens, params))

    assert hidden.shape == (1, batch, hidden_size)
    assert jnp.allclose(hidden, hidden_ref, atol=1e-5, rtol=1e-5)
    print("KERNEL_OK")
</pallas_src>

<mosaic_0001>
module attributes {stable_mosaic.version = 11 : i64} {
  func.func @gru_kernel(%arg0: i32, %arg1: memref<64x32xf32, #tpu.memory_space<vmem>>, %arg2: memref<32x384xf32, #tpu.memory_space<vmem>>, %arg3: memref<128x384xf32, #tpu.memory_space<vmem>>, %arg4: memref<1x384xf32, #tpu.memory_space<vmem>>, %arg5: memref<1x384xf32, #tpu.memory_space<vmem>>, %arg6: memref<8x128xf32, #tpu.memory_space<vmem>>, %arg7: memref<64x384xf32, #tpu.memory_space<vmem>>) attributes {dimension_semantics = [#tpu.dimension_semantics<arbitrary>], iteration_bounds = array<i64: 1>, scalar_prefetch = 0 : i64, scratch_operands = 1 : i64, tpu.core_type = #tpu.core_type<tc>, window_params = [{transform_indices = @transform_0, window_bounds = array<i64: 64, 32>}, {pipeline_mode = #tpu.pipeline_mode<synchronous>, transform_indices = @transform_1, window_bounds = array<i64: 32, 384>}, {pipeline_mode = #tpu.pipeline_mode<synchronous>, transform_indices = @transform_2, window_bounds = array<i64: 128, 384>}, {pipeline_mode = #tpu.pipeline_mode<synchronous>, transform_indices = @transform_3, window_bounds = array<i64: 1, 384>}, {pipeline_mode = #tpu.pipeline_mode<synchronous>, transform_indices = @transform_4, window_bounds = array<i64: 1, 384>}, {pipeline_mode = #tpu.pipeline_mode<synchronous>, transform_indices = @transform_5, window_bounds = array<i64: 8, 128>}]} {
    %c0_i32 = arith.constant 0 : i32
    %0 = arith.cmpi eq, %arg0, %c0_i32 : i32
    %1 = arith.extui %0 : i1 to i32
    %c0_i32_0 = arith.constant 0 : i32
    %2 = arith.cmpi ne, %1, %c0_i32_0 : i32
    scf.if %2 {
      %cst_81 = arith.constant 0.000000e+00 : f32
      %302 = vector.broadcast %cst_81 : f32 to vector<8x128xf32>
      %c0_82 = arith.constant 0 : index
      %c0_83 = arith.constant 0 : index
      %303 = vector.load %arg6[%c0_82, %c0_83] : memref<8x128xf32, #tpu.memory_space<vmem>>, vector<8x128xf32>
      tpu.vector_store %arg6[%c0_82, %c0_83], %302 {strides = array<i32>} : memref<8x128xf32, #tpu.memory_space<vmem>>, vector<8x128xf32>,
    } else {
    }
    %c0 = arith.constant 0 : index
    %c0_1 = arith.constant 0 : index
    %3 = vector.load %arg1[%c0, %c0_1] : memref<64x32xf32, #tpu.memory_space<vmem>>, vector<64x32xf32>
    %c0_2 = arith.constant 0 : index
    %c0_3 = arith.constant 0 : index
    %4 = vector.load %arg2[%c0_2, %c0_3] : memref<32x384xf32, #tpu.memory_space<vmem>>, vector<32x384xf32>
    %cst = arith.constant dense<0.000000e+00> : vector<64x384xf32>
    %5 = tpu.matmul %3, %4, %cst {dimension_numbers = #tpu.dot_dimension_numbers<[1], [0], [0], [1], [0, 0, 1, 1], [], []>} : vector<64x32xf32>, vector<32x384xf32>, vector<64x384xf32> -> vector<64x384xf32>
    %c0_4 = arith.constant 0 : index
    %c0_5 = arith.constant 0 : index
    %6 = vector.load %arg4[%c0_4, %c0_5] : memref<1x384xf32, #tpu.memory_space<vmem>>, vector<1x384xf32>
    %7 = vector.broadcast %6 : vector<1x384xf32> to vector<64x384xf32>
    %8 = arith.addf %5, %7 : vector<64x384xf32>
    %c0_6 = arith.constant 0 : index
    %c0_7 = arith.constant 0 : index
    %9 = vector.load %arg7[%c0_6, %c0_7] : memref<64x384xf32, #tpu.memory_space<vmem>>, vector<64x384xf32>
    tpu.vector_store %arg7[%c0_6, %c0_7], %8 {strides = array<i32>} : memref<64x384xf32, #tpu.memory_space<vmem>>, vector<64x384xf32>,
    %c0_8 = arith.constant 0 : index
    %c0_9 = arith.constant 0 : index
    %10 = vector.load %arg3[%c0_8, %c0_9] : memref<128x384xf32, #tpu.memory_space<vmem>>, vector<128x384xf32>
    %c0_10 = arith.constant 0 : index
    %c0_11 = arith.constant 0 : index
    %11 = vector.load %arg5[%c0_10, %c0_11] : memref<1x384xf32, #tpu.memory_space<vmem>>, vector<1x384xf32>
    %c0_12 = arith.constant 0 : index
    %c0_13 = arith.constant 0 : index
    %12 = vector.load %arg6[%c0_12, %c0_13] : memref<8x128xf32, #tpu.memory_space<vmem>>, vector<8x128xf32>
    %c0_i32_14 = arith.constant 0 : i32
    %c8_i32 = arith.constant 8 : i32
    %13 = arith.muli %arg0, %c8_i32 : i32
    %14 = arith.addi %13, %c0_i32_14 : i32
    %c8_i32_15 = arith.constant 8 : i32
    %15 = arith.muli %c0_i32_14, %c8_i32_15 : i32
    %16 = arith.index_cast %15 : i32 to index
    %c0_16 = arith.constant 0 : index
    %17 = vector.load %arg7[%16, %c0_16] : memref<64x384xf32, #tpu.memory_space<vmem>>, vector<8x384xf32>
    %cst_17 = arith.constant dense<0.000000e+00> : vector<8x384xf32>
    %18 = tpu.matmul %12, %10, %cst_17 {dimension_numbers = #tpu.dot_dimension_numbers<[1], [0], [0], [1], [0, 0, 1, 1], [], []>} : vector<8x128xf32>, vector<128x384xf32>, vector<8x384xf32> -> vector<8x384xf32>
    %19 = vector.broadcast %11 : vector<1x384xf32> to vector<8x384xf32>
    %20 = arith.addf %18, %19 : vector<8x384xf32>
    %21 = vector.extract_strided_slice %17 {offsets = [0, 0], sizes = [8, 128], strides = [1, 1]} : vector<8x384xf32> to vector<8x128xf32>
    %22 = vector.extract_strided_slice %20 {offsets = [0, 0], sizes = [8, 128], strides = [1, 1]} : vector<8x384xf32> to vector<8x128xf32>
    %23 = arith.addf %21, %22 : vector<8x128xf32>
    %24 = arith.negf %23 : vector<8x128xf32>
    %25 = math.exp %24 : vector<8x128xf32>
    %cst_18 = arith.constant 1.000000e+00 : f32
    %26 = vector.broadcast %cst_18 : f32 to vector<8x128xf32>
    %27 = arith.addf %26, %25 : vector<8x128xf32>
    %28 = arith.divf %26, %27 : vector<8x128xf32>
    %29 = vector.extract_strided_slice %17 {offsets = [0, 128], sizes = [8, 128], strides = [1, 1]} : vector<8x384xf32> to vector<8x128xf32>
    %30 = vector.extract_strided_slice %20 {offsets = [0, 128], sizes = [8, 128], strides = [1, 1]} : vector<8x384xf32> to vector<8x128xf32>
    %31 = arith.addf %29, %30 : vector<8x128xf32>
    %32 = arith.negf %31 : vector<8x128xf32>
    %33 = math.exp %32 : vector<8x128xf32>
    %cst_19 = arith.constant 1.000000e+00 : f32
    %34 = vector.broadcast %cst_19 : f32 to vector<8x128xf32>
    %35 = arith.addf %34, %33 : vector<8x128xf32>
    %36 = arith.divf %34, %35 : vector<8x128xf32>
    %37 = vector.extract_strided_slice %17 {offsets = [0, 256], sizes = [8, 128], strides = [1, 1]} : vector<8x384xf32> to vector<8x128xf32>
    %38 = vector.extract_strided_slice %20 {offsets = [0, 256], sizes = [8, 128], strides = [1, 1]} : vector<8x384xf32> to vector<8x128xf32>
    %39 = arith.mulf %28, %38 : vector<8x128xf32>
    %40 = arith.addf %37, %39 : vector<8x128xf32>
    %41 = math.tanh %40 : vector<8x128xf32>
    %cst_20 = arith.constant 1.000000e+00 : f32
    %42 = vector.broadcast %cst_20 : f32 to vector<8x128xf32>
    %43 = arith.subf %42, %36 : vector<8x128xf32>
    %44 = arith.mulf %43, %41 : vector<8x128xf32>
    %45 = arith.mulf %36, %12 : vector<8x128xf32>
    %46 = arith.addf %44, %45 : vector<8x128xf32>
    %c8_i32_21 = arith.constant 8 : i32
    %47 = arith.cmpi slt, %14, %c8_i32_21 : i32
    %48 = arith.select %47, %46, %12 : vector<8x128xf32>
    %c1_i32 = arith.constant 1 : i32
    %c8_i32_22 = arith.constant 8 : i32
    %49 = arith.muli %arg0, %c8_i32_22 : i32
    %50 = arith.addi %49, %c1_i32 : i32
    %c8_i32_23 = arith.constant 8 : i32
    %51 = arith.muli %c1_i32, %c8_i32_23 : i32
    %52 = arith.index_cast %51 : i32 to index
    %c0_24 = arith.constant 0 : index
    %53 = vector.load %arg7[%52, %c0_24] : memref<64x384xf32, #tpu.memory_space<vmem>>, vector<8x384xf32>
    %cst_25 = arith.constant dense<0.000000e+00> : vector<8x384xf32>
    %54 = tpu.matmul %48, %10, %cst_25 {dimension_numbers = #tpu.dot_dimension_numbers<[1], [0], [0], [1], [0, 0, 1, 1], [], []>} : vector<8x128xf32>, vector<128x384xf32>, vector<8x384xf32> -> vector<8x384xf32>
    %55 = vector.broadcast %11 : vector<1x384xf32> to vector<8x384xf32>
    %56 = arith.addf %54, %55 : vector<8x384xf32>
    %57 = vector.extract_strided_slice %53 {offsets = [0, 0], sizes = [8, 128], strides = [1, 1]} : vector<8x384xf32> to vector<8x128xf32>
    %58 = vector.extract_strided_slice %56 {offsets = [0, 0], sizes = [8, 128], strides = [1, 1]} : vector<8x384xf32> to vector<8x128xf32>
    %59 = arith.addf %57, %58 : vector<8x128xf32>
    %60 = arith.negf %59 : vector<8x128xf32>
    %61 = math.exp %60 : vector<8x128xf32>
    %cst_26 = arith.constant 1.000000e+00 : f32
    %62 = vector.broadcast %cst_26 : f32 to vector<8x128xf32>
    %63 = arith.addf %62, %61 : vector<8x128xf32>
    %64 = arith.divf %62, %63 : vector<8x128xf32>
    %65 = vector.extract_strided_slice %53 {offsets = [0, 128], sizes = [8, 128], strides = [1, 1]} : vector<8x384xf32> to vector<8x128xf32>
    %66 = vector.extract_strided_slice %56 {offsets = [0, 128], sizes = [8, 128], strides = [1, 1]} : vector<8x384xf32> to vector<8x128xf32>
    %67 = arith.addf %65, %66 : vector<8x128xf32>
    %68 = arith.negf %67 : vector<8x128xf32>
    %69 = math.exp %68 : vector<8x128xf32>
    %cst_27 = arith.constant 1.000000e+00 : f32
    %70 = vector.broadcast %cst_27 : f32 to vector<8x128xf32>
    %71 = arith.addf %70, %69 : vector<8x128xf32>
    %72 = arith.divf %70, %71 : vector<8x128xf32>
    %73 = vector.extract_strided_slice %53 {offsets = [0, 256], sizes = [8, 128], strides = [1, 1]} : vector<8x384xf32> to vector<8x128xf32>
    %74 = vector.extract_strided_slice %56 {offsets = [0, 256], sizes = [8, 128], strides = [1, 1]} : vector<8x384xf32> to vector<8x128xf32>
    %75 = arith.mulf %64, %74 : vector<8x128xf32>
    %76 = arith.addf %73, %75 : vector<8x128xf32>
    %77 = math.tanh %76 : vector<8x128xf32>
    %cst_28 = arith.constant 1.000000e+00 : f32
    %78 = vector.broadcast %cst_28 : f32 to vector<8x128xf32>
    %79 = arith.subf %78, %72 : vector<8x128xf32>
    %80 = arith.mulf %79, %77 : vector<8x128xf32>
    %81 = arith.mulf %72, %48 : vector<8x128xf32>
    %82 = arith.addf %80, %81 : vector<8x128xf32>
    %c8_i32_29 = arith.constant 8 : i32
    %83 = arith.cmpi slt, %50, %c8_i32_29 : i32
    %84 = arith.select %83, %82, %48 : vector<8x128xf32>
    %c2_i32 = arith.constant 2 : i32
    %c8_i32_30 = arith.constant 8 : i32
    %85 = arith.muli %arg0, %c8_i32_30 : i32
    %86 = arith.addi %85, %c2_i32 : i32
    %c8_i32_31 = arith.constant 8 : i32
    %87 = arith.muli %c2_i32, %c8_i32_31 : i32
    %88 = arith.index_cast %87 : i32 to index
    %c0_32 = arith.constant 0 : index
    %89 = vector.load %arg7[%88, %c0_32] : memref<64x384xf32, #tpu.memory_space<vmem>>, vector<8x384xf32>
    %cst_33 = arith.constant dense<0.000000e+00> : vector<8x384xf32>
    %90 = tpu.matmul %84, %10, %cst_33 {dimension_numbers = #tpu.dot_dimension_numbers<[1], [0], [0], [1], [0, 0, 1, 1], [], []>} : vector<8x128xf32>, vector<128x384xf32>, vector<8x384xf32> -> vector<8x384xf32>
    %91 = vector.broadcast %11 : vector<1x384xf32> to vector<8x384xf32>
    %92 = arith.addf %90, %91 : vector<8x384xf32>
    %93 = vector.extract_strided_slice %89 {offsets = [0, 0], sizes = [8, 128], strides = [1, 1]} : vector<8x384xf32> to vector<8x128xf32>
    %94 = vector.extract_strided_slice %92 {offsets = [0, 0], sizes = [8, 128], strides = [1, 1]} : vector<8x384xf32> to vector<8x128xf32>
    %95 = arith.addf %93, %94 : vector<8x128xf32>
    %96 = arith.negf %95 : vector<8x128xf32>
    %97 = math.exp %96 : vector<8x128xf32>
    %cst_34 = arith.constant 1.000000e+00 : f32
    %98 = vector.broadcast %cst_34 : f32 to vector<8x128xf32>
    %99 = arith.addf %98, %97 : vector<8x128xf32>
    %100 = arith.divf %98, %99 : vector<8x128xf32>
    %101 = vector.extract_strided_slice %89 {offsets = [0, 128], sizes = [8, 128], strides = [1, 1]} : vector<8x384xf32> to vector<8x128xf32>
    %102 = vector.extract_strided_slice %92 {offsets = [0, 128], sizes = [8, 128], strides = [1, 1]} : vector<8x384xf32> to vector<8x128xf32>
    %103 = arith.addf %101, %102 : vector<8x128xf32>
    %104 = arith.negf %103 : vector<8x128xf32>
    %105 = math.exp %104 : vector<8x128xf32>
    %cst_35 = arith.constant 1.000000e+00 : f32
    %106 = vector.broadcast %cst_35 : f32 to vector<8x128xf32>
    %107 = arith.addf %106, %105 : vector<8x128xf32>
    %108 = arith.divf %106, %107 : vector<8x128xf32>
    %109 = vector.extract_strided_slice %89 {offsets = [0, 256], sizes = [8, 128], strides = [1, 1]} : vector<8x384xf32> to vector<8x128xf32>
    %110 = vector.extract_strided_slice %92 {offsets = [0, 256], sizes = [8, 128], strides = [1, 1]} : vector<8x384xf32> to vector<8x128xf32>
    %111 = arith.mulf %100, %110 : vector<8x128xf32>
    %112 = arith.addf %109, %111 : vector<8x128xf32>
    %113 = math.tanh %112 : vector<8x128xf32>
    %cst_36 = arith.constant 1.000000e+00 : f32
    %114 = vector.broadcast %cst_36 : f32 to vector<8x128xf32>
    %115 = arith.subf %114, %108 : vector<8x128xf32>
    %116 = arith.mulf %115, %113 : vector<8x128xf32>
    %117 = arith.mulf %108, %84 : vector<8x128xf32>
    %118 = arith.addf %116, %117 : vector<8x128xf32>
    %c8_i32_37 = arith.constant 8 : i32
    %119 = arith.cmpi slt, %86, %c8_i32_37 : i32
    %120 = arith.select %119, %118, %84 : vector<8x128xf32>
    %c3_i32 = arith.constant 3 : i32
    %c8_i32_38 = arith.constant 8 : i32
    %121 = arith.muli %arg0, %c8_i32_38 : i32
    %122 = arith.addi %121, %c3_i32 : i32
    %c8_i32_39 = arith.constant 8 : i32
    %123 = arith.muli %c3_i32, %c8_i32_39 : i32
    %124 = arith.index_cast %123 : i32 to index
    %c0_40 = arith.constant 0 : index
    %125 = vector.load %arg7[%124, %c0_40] : memref<64x384xf32, #tpu.memory_space<vmem>>, vector<8x384xf32>
    %cst_41 = arith.constant dense<0.000000e+00> : vector<8x384xf32>
    %126 = tpu.matmul %120, %10, %cst_41 {dimension_numbers = #tpu.dot_dimension_numbers<[1], [0], [0], [1], [0, 0, 1, 1], [], []>} : vector<8x128xf32>, vector<128x384xf32>, vector<8x384xf32> -> vector<8x384xf32>
    %127 = vector.broadcast %11 : vector<1x384xf32> to vector<8x384xf32>
    %128 = arith.addf %126, %127 : vector<8x384xf32>
    %129 = vector.extract_strided_slice %125 {offsets = [0, 0], sizes = [8, 128], strides = [1, 1]} : vector<8x384xf32> to vector<8x128xf32>
    %130 = vector.extract_strided_slice %128 {offsets = [0, 0], sizes = [8, 128], strides = [1, 1]} : vector<8x384xf32> to vector<8x128xf32>
    %131 = arith.addf %129, %130 : vector<8x128xf32>
    %132 = arith.negf %131 : vector<8x128xf32>
    %133 = math.exp %132 : vector<8x128xf32>
    %cst_42 = arith.constant 1.000000e+00 : f32
    %134 = vector.broadcast %cst_42 : f32 to vector<8x128xf32>
    %135 = arith.addf %134, %133 : vector<8x128xf32>
    %136 = arith.divf %134, %135 : vector<8x128xf32>
    %137 = vector.extract_strided_slice %125 {offsets = [0, 128], sizes = [8, 128], strides = [1, 1]} : vector<8x384xf32> to vector<8x128xf32>
    %138 = vector.extract_strided_slice %128 {offsets = [0, 128], sizes = [8, 128], strides = [1, 1]} : vector<8x384xf32> to vector<8x128xf32>
    %139 = arith.addf %137, %138 : vector<8x128xf32>
    %140 = arith.negf %139 : vector<8x128xf32>
    %141 = math.exp %140 : vector<8x128xf32>
    %cst_43 = arith.constant 1.000000e+00 : f32
    %142 = vector.broadcast %cst_43 : f32 to vector<8x128xf32>
    %143 = arith.addf %142, %141 : vector<8x128xf32>
    %144 = arith.divf %142, %143 : vector<8x128xf32>
    %145 = vector.extract_strided_slice %125 {offsets = [0, 256], sizes = [8, 128], strides = [1, 1]} : vector<8x384xf32> to vector<8x128xf32>
    %146 = vector.extract_strided_slice %128 {offsets = [0, 256], sizes = [8, 128], strides = [1, 1]} : vector<8x384xf32> to vector<8x128xf32>
    %147 = arith.mulf %136, %146 : vector<8x128xf32>
    %148 = arith.addf %145, %147 : vector<8x128xf32>
    %149 = math.tanh %148 : vector<8x128xf32>
    %cst_44 = arith.constant 1.000000e+00 : f32
    %150 = vector.broadcast %cst_44 : f32 to vector<8x128xf32>
    %151 = arith.subf %150, %144 : vector<8x128xf32>
    %152 = arith.mulf %151, %149 : vector<8x128xf32>
    %153 = arith.mulf %144, %120 : vector<8x128xf32>
    %154 = arith.addf %152, %153 : vector<8x128xf32>
    %c8_i32_45 = arith.constant 8 : i32
    %155 = arith.cmpi slt, %122, %c8_i32_45 : i32
    %156 = arith.select %155, %154, %120 : vector<8x128xf32>
    %c4_i32 = arith.constant 4 : i32
    %c8_i32_46 = arith.constant 8 : i32
    %157 = arith.muli %arg0, %c8_i32_46 : i32
    %158 = arith.addi %157, %c4_i32 : i32
    %c8_i32_47 = arith.constant 8 : i32
    %159 = arith.muli %c4_i32, %c8_i32_47 : i32
    %160 = arith.index_cast %159 : i32 to index
    %c0_48 = arith.constant 0 : index
    %161 = vector.load %arg7[%160, %c0_48] : memref<64x384xf32, #tpu.memory_space<vmem>>, vector<8x384xf32>
    %cst_49 = arith.constant dense<0.000000e+00> : vector<8x384xf32>
    %162 = tpu.matmul %156, %10, %cst_49 {dimension_numbers = #tpu.dot_dimension_numbers<[1], [0], [0], [1], [0, 0, 1, 1], [], []>} : vector<8x128xf32>, vector<128x384xf32>, vector<8x384xf32> -> vector<8x384xf32>
    %163 = vector.broadcast %11 : vector<1x384xf32> to vector<8x384xf32>
    %164 = arith.addf %162, %163 : vector<8x384xf32>
    %165 = vector.extract_strided_slice %161 {offsets = [0, 0], sizes = [8, 128], strides = [1, 1]} : vector<8x384xf32> to vector<8x128xf32>
    %166 = vector.extract_strided_slice %164 {offsets = [0, 0], sizes = [8, 128], strides = [1, 1]} : vector<8x384xf32> to vector<8x128xf32>
    %167 = arith.addf %165, %166 : vector<8x128xf32>
    %168 = arith.negf %167 : vector<8x128xf32>
    %169 = math.exp %168 : vector<8x128xf32>
    %cst_50 = arith.constant 1.000000e+00 : f32
    %170 = vector.broadcast %cst_50 : f32 to vector<8x128xf32>
    %171 = arith.addf %170, %169 : vector<8x128xf32>
    %172 = arith.divf %170, %171 : vector<8x128xf32>
    %173 = vector.extract_strided_slice %161 {offsets = [0, 128], sizes = [8, 128], strides = [1, 1]} : vector<8x384xf32> to vector<8x128xf32>
    %174 = vector.extract_strided_slice %164 {offsets = [0, 128], sizes = [8, 128], strides = [1, 1]} : vector<8x384xf32> to vector<8x128xf32>
    %175 = arith.addf %173, %174 : vector<8x128xf32>
    %176 = arith.negf %175 : vector<8x128xf32>
    %177 = math.exp %176 : vector<8x128xf32>
    %cst_51 = arith.constant 1.000000e+00 : f32
    %178 = vector.broadcast %cst_51 : f32 to vector<8x128xf32>
    %179 = arith.addf %178, %177 : vector<8x128xf32>
    %180 = arith.divf %178, %179 : vector<8x128xf32>
    %181 = vector.extract_strided_slice %161 {offsets = [0, 256], sizes = [8, 128], strides = [1, 1]} : vector<8x384xf32> to vector<8x128xf32>
    %182 = vector.extract_strided_slice %164 {offsets = [0, 256], sizes = [8, 128], strides = [1, 1]} : vector<8x384xf32> to vector<8x128xf32>
    %183 = arith.mulf %172, %182 : vector<8x128xf32>
    %184 = arith.addf %181, %183 : vector<8x128xf32>
    %185 = math.tanh %184 : vector<8x128xf32>
    %cst_52 = arith.constant 1.000000e+00 : f32
    %186 = vector.broadcast %cst_52 : f32 to vector<8x128xf32>
    %187 = arith.subf %186, %180 : vector<8x128xf32>
    %188 = arith.mulf %187, %185 : vector<8x128xf32>
    %189 = arith.mulf %180, %156 : vector<8x128xf32>
    %190 = arith.addf %188, %189 : vector<8x128xf32>
    %c8_i32_53 = arith.constant 8 : i32
    %191 = arith.cmpi slt, %158, %c8_i32_53 : i32
    %192 = arith.select %191, %190, %156 : vector<8x128xf32>
    %c5_i32 = arith.constant 5 : i32
    %c8_i32_54 = arith.constant 8 : i32
    %193 = arith.muli %arg0, %c8_i32_54 : i32
    %194 = arith.addi %193, %c5_i32 : i32
    %c8_i32_55 = arith.constant 8 : i32
    %195 = arith.muli %c5_i32, %c8_i32_55 : i32
    %196 = arith.index_cast %195 : i32 to index
    %c0_56 = arith.constant 0 : index
    %197 = vector.load %arg7[%196, %c0_56] : memref<64x384xf32, #tpu.memory_space<vmem>>, vector<8x384xf32>
    %cst_57 = arith.constant dense<0.000000e+00> : vector<8x384xf32>
    %198 = tpu.matmul %192, %10, %cst_57 {dimension_numbers = #tpu.dot_dimension_numbers<[1], [0], [0], [1], [0, 0, 1, 1], [], []>} : vector<8x128xf32>, vector<128x384xf32>, vector<8x384xf32> -> vector<8x384xf32>
    %199 = vector.broadcast %11 : vector<1x384xf32> to vector<8x384xf32>
    %200 = arith.addf %198, %199 : vector<8x384xf32>
    %201 = vector.extract_strided_slice %197 {offsets = [0, 0], sizes = [8, 128], strides = [1, 1]} : vector<8x384xf32> to vector<8x128xf32>
    %202 = vector.extract_strided_slice %200 {offsets = [0, 0], sizes = [8, 128], strides = [1, 1]} : vector<8x384xf32> to vector<8x128xf32>
    %203 = arith.addf %201, %202 : vector<8x128xf32>
    %204 = arith.negf %203 : vector<8x128xf32>
    %205 = math.exp %204 : vector<8x128xf32>
    %cst_58 = arith.constant 1.000000e+00 : f32
    %206 = vector.broadcast %cst_58 : f32 to vector<8x128xf32>
    %207 = arith.addf %206, %205 : vector<8x128xf32>
    %208 = arith.divf %206, %207 : vector<8x128xf32>
    %209 = vector.extract_strided_slice %197 {offsets = [0, 128], sizes = [8, 128], strides = [1, 1]} : vector<8x384xf32> to vector<8x128xf32>
    %210 = vector.extract_strided_slice %200 {offsets = [0, 128], sizes = [8, 128], strides = [1, 1]} : vector<8x384xf32> to vector<8x128xf32>
    %211 = arith.addf %209, %210 : vector<8x128xf32>
    %212 = arith.negf %211 : vector<8x128xf32>
    %213 = math.exp %212 : vector<8x128xf32>
    %cst_59 = arith.constant 1.000000e+00 : f32
    %214 = vector.broadcast %cst_59 : f32 to vector<8x128xf32>
    %215 = arith.addf %214, %213 : vector<8x128xf32>
    %216 = arith.divf %214, %215 : vector<8x128xf32>
    %217 = vector.extract_strided_slice %197 {offsets = [0, 256], sizes = [8, 128], strides = [1, 1]} : vector<8x384xf32> to vector<8x128xf32>
    %218 = vector.extract_strided_slice %200 {offsets = [0, 256], sizes = [8, 128], strides = [1, 1]} : vector<8x384xf32> to vector<8x128xf32>
    %219 = arith.mulf %208, %218 : vector<8x128xf32>
    %220 = arith.addf %217, %219 : vector<8x128xf32>
    %221 = math.tanh %220 : vector<8x128xf32>
    %cst_60 = arith.constant 1.000000e+00 : f32
    %222 = vector.broadcast %cst_60 : f32 to vector<8x128xf32>
    %223 = arith.subf %222, %216 : vector<8x128xf32>
    %224 = arith.mulf %223, %221 : vector<8x128xf32>
    %225 = arith.mulf %216, %192 : vector<8x128xf32>
    %226 = arith.addf %224, %225 : vector<8x128xf32>
    %c8_i32_61 = arith.constant 8 : i32
    %227 = arith.cmpi slt, %194, %c8_i32_61 : i32
    %228 = arith.select %227, %226, %192 : vector<8x128xf32>
    %c6_i32 = arith.constant 6 : i32
    %c8_i32_62 = arith.constant 8 : i32
    %229 = arith.muli %arg0, %c8_i32_62 : i32
    %230 = arith.addi %229, %c6_i32 : i32
    %c8_i32_63 = arith.constant 8 : i32
    %231 = arith.muli %c6_i32, %c8_i32_63 : i32
    %232 = arith.index_cast %231 : i32 to index
    %c0_64 = arith.constant 0 : index
    %233 = vector.load %arg7[%232, %c0_64] : memref<64x384xf32, #tpu.memory_space<vmem>>, vector<8x384xf32>
    %cst_65 = arith.constant dense<0.000000e+00> : vector<8x384xf32>
    %234 = tpu.matmul %228, %10, %cst_65 {dimension_numbers = #tpu.dot_dimension_numbers<[1], [0], [0], [1], [0, 0, 1, 1], [], []>} : vector<8x128xf32>, vector<128x384xf32>, vector<8x384xf32> -> vector<8x384xf32>
    %235 = vector.broadcast %11 : vector<1x384xf32> to vector<8x384xf32>
    %236 = arith.addf %234, %235 : vector<8x384xf32>
    %237 = vector.extract_strided_slice %233 {offsets = [0, 0], sizes = [8, 128], strides = [1, 1]} : vector<8x384xf32> to vector<8x128xf32>
    %238 = vector.extract_strided_slice %236 {offsets = [0, 0], sizes = [8, 128], strides = [1, 1]} : vector<8x384xf32> to vector<8x128xf32>
    %239 = arith.addf %237, %238 : vector<8x128xf32>
    %240 = arith.negf %239 : vector<8x128xf32>
    %241 = math.exp %240 : vector<8x128xf32>
    %cst_66 = arith.constant 1.000000e+00 : f32
    %242 = vector.broadcast %cst_66 : f32 to vector<8x128xf32>
    %243 = arith.addf %242, %241 : vector<8x128xf32>
    %244 = arith.divf %242, %243 : vector<8x128xf32>
    %245 = vector.extract_strided_slice %233 {offsets = [0, 128], sizes = [8, 128], strides = [1, 1]} : vector<8x384xf32> to vector<8x128xf32>
    %246 = vector.extract_strided_slice %236 {offsets = [0, 128], sizes = [8, 128], strides = [1, 1]} : vector<8x384xf32> to vector<8x128xf32>
    %247 = arith.addf %245, %246 : vector<8x128xf32>
    %248 = arith.negf %247 : vector<8x128xf32>
    %249 = math.exp %248 : vector<8x128xf32>
    %cst_67 = arith.constant 1.000000e+00 : f32
    %250 = vector.broadcast %cst_67 : f32 to vector<8x128xf32>
    %251 = arith.addf %250, %249 : vector<8x128xf32>
    %252 = arith.divf %250, %251 : vector<8x128xf32>
    %253 = vector.extract_strided_slice %233 {offsets = [0, 256], sizes = [8, 128], strides = [1, 1]} : vector<8x384xf32> to vector<8x128xf32>
    %254 = vector.extract_strided_slice %236 {offsets = [0, 256], sizes = [8, 128], strides = [1, 1]} : vector<8x384xf32> to vector<8x128xf32>
    %255 = arith.mulf %244, %254 : vector<8x128xf32>
    %256 = arith.addf %253, %255 : vector<8x128xf32>
    %257 = math.tanh %256 : vector<8x128xf32>
    %cst_68 = arith.constant 1.000000e+00 : f32
    %258 = vector.broadcast %cst_68 : f32 to vector<8x128xf32>
    %259 = arith.subf %258, %252 : vector<8x128xf32>
    %260 = arith.mulf %259, %257 : vector<8x128xf32>
    %261 = arith.mulf %252, %228 : vector<8x128xf32>
    %262 = arith.addf %260, %261 : vector<8x128xf32>
    %c8_i32_69 = arith.constant 8 : i32
    %263 = arith.cmpi slt, %230, %c8_i32_69 : i32
    %264 = arith.select %263, %262, %228 : vector<8x128xf32>
    %c7_i32 = arith.constant 7 : i32
    %c8_i32_70 = arith.constant 8 : i32
    %265 = arith.muli %arg0, %c8_i32_70 : i32
    %266 = arith.addi %265, %c7_i32 : i32
    %c8_i32_71 = arith.constant 8 : i32
    %267 = arith.muli %c7_i32, %c8_i32_71 : i32
    %268 = arith.index_cast %267 : i32 to index
    %c0_72 = arith.constant 0 : index
    %269 = vector.load %arg7[%268, %c0_72] : memref<64x384xf32, #tpu.memory_space<vmem>>, vector<8x384xf32>
    %cst_73 = arith.constant dense<0.000000e+00> : vector<8x384xf32>
    %270 = tpu.matmul %264, %10, %cst_73 {dimension_numbers = #tpu.dot_dimension_numbers<[1], [0], [0], [1], [0, 0, 1, 1], [], []>} : vector<8x128xf32>, vector<128x384xf32>, vector<8x384xf32> -> vector<8x384xf32>
    %271 = vector.broadcast %11 : vector<1x384xf32> to vector<8x384xf32>
    %272 = arith.addf %270, %271 : vector<8x384xf32>
    %273 = vector.extract_strided_slice %269 {offsets = [0, 0], sizes = [8, 128], strides = [1, 1]} : vector<8x384xf32> to vector<8x128xf32>
    %274 = vector.extract_strided_slice %272 {offsets = [0, 0], sizes = [8, 128], strides = [1, 1]} : vector<8x384xf32> to vector<8x128xf32>
    %275 = arith.addf %273, %274 : vector<8x128xf32>
    %276 = arith.negf %275 : vector<8x128xf32>
    %277 = math.exp %276 : vector<8x128xf32>
    %cst_74 = arith.constant 1.000000e+00 : f32
    %278 = vector.broadcast %cst_74 : f32 to vector<8x128xf32>
    %279 = arith.addf %278, %277 : vector<8x128xf32>
    %280 = arith.divf %278, %279 : vector<8x128xf32>
    %281 = vector.extract_strided_slice %269 {offsets = [0, 128], sizes = [8, 128], strides = [1, 1]} : vector<8x384xf32> to vector<8x128xf32>
    %282 = vector.extract_strided_slice %272 {offsets = [0, 128], sizes = [8, 128], strides = [1, 1]} : vector<8x384xf32> to vector<8x128xf32>
    %283 = arith.addf %281, %282 : vector<8x128xf32>
    %284 = arith.negf %283 : vector<8x128xf32>
    %285 = math.exp %284 : vector<8x128xf32>
    %cst_75 = arith.constant 1.000000e+00 : f32
    %286 = vector.broadcast %cst_75 : f32 to vector<8x128xf32>
    %287 = arith.addf %286, %285 : vector<8x128xf32>
    %288 = arith.divf %286, %287 : vector<8x128xf32>
    %289 = vector.extract_strided_slice %269 {offsets = [0, 256], sizes = [8, 128], strides = [1, 1]} : vector<8x384xf32> to vector<8x128xf32>
    %290 = vector.extract_strided_slice %272 {offsets = [0, 256], sizes = [8, 128], strides = [1, 1]} : vector<8x384xf32> to vector<8x128xf32>
    %291 = arith.mulf %280, %290 : vector<8x128xf32>
    %292 = arith.addf %289, %291 : vector<8x128xf32>
    %293 = math.tanh %292 : vector<8x128xf32>
    %cst_76 = arith.constant 1.000000e+00 : f32
    %294 = vector.broadcast %cst_76 : f32 to vector<8x128xf32>
    %295 = arith.subf %294, %288 : vector<8x128xf32>
    %296 = arith.mulf %295, %293 : vector<8x128xf32>
    %297 = arith.mulf %288, %264 : vector<8x128xf32>
    %298 = arith.addf %296, %297 : vector<8x128xf32>
    %c8_i32_77 = arith.constant 8 : i32
    %299 = arith.cmpi slt, %266, %c8_i32_77 : i32
    %300 = arith.select %299, %298, %264 : vector<8x128xf32>
    %c8_i32_78 = arith.constant 8 : i32
    %c0_79 = arith.constant 0 : index
    %c0_80 = arith.constant 0 : index
    %301 = vector.load %arg6[%c0_79, %c0_80] : memref<8x128xf32, #tpu.memory_space<vmem>>, vector<8x128xf32>
    tpu.vector_store %arg6[%c0_79, %c0_80], %300 {strides = array<i32>} : memref<8x128xf32, #tpu.memory_space<vmem>>, vector<8x128xf32>,
    return
  }
  func.func @transform_0(%arg0: i32) -> (i32, i32) {
    %c0_i32 = arith.constant 0 : i32
    %c0_i32_0 = arith.constant 0 : i32
    return %arg0, %c0_i32 : i32, i32
  }
  func.func @transform_1(%arg0: i32) -> (i32, i32) {
    %c0_i32 = arith.constant 0 : i32
    %c0_i32_0 = arith.constant 0 : i32
    %c0_i32_1 = arith.constant 0 : i32
    return %c0_i32, %c0_i32_0 : i32, i32
  }
  func.func @transform_2(%arg0: i32) -> (i32, i32) {
    %c0_i32 = arith.constant 0 : i32
    %c0_i32_0 = arith.constant 0 : i32
    %c0_i32_1 = arith.constant 0 : i32
    return %c0_i32, %c0_i32_0 : i32, i32
  }
  func.func @transform_3(%arg0: i32) -> (i32, i32) {
    %c0_i32 = arith.constant 0 : i32
    %c0_i32_0 = arith.constant 0 : i32
    %c0_i32_1 = arith.constant 0 : i32
    return %c0_i32, %c0_i32_0 : i32, i32
  }
  func.func @transform_4(%arg0: i32) -> (i32, i32) {
    %c0_i32 = arith.constant 0 : i32
    %c0_i32_0 = arith.constant 0 : i32
    %c0_i32_1 = arith.constant 0 : i32
    return %c0_i32, %c0_i32_0 : i32, i32
  }
  func.func @transform_5(%arg0: i32) -> (i32, i32) {
    %c0_i32 = arith.constant 0 : i32
    %c0_i32_0 = arith.constant 0 : i32
    %c0_i32_1 = arith.constant 0 : i32
    return %c0_i32, %c0_i32_0 : i32, i32
  }
}

</mosaic_0001>

<llo_original>
// kernel: tpu_custom_call.1
$region0: #{tpu_custom_call.1}
  #allocation0 [shape = 'u32[]', space=smem, size = 0x4, offset = 0x4, fixed_abs, tag = 'smem constant byte address 0x4 - core index']
  #allocation1 [shape = 'u32[72,128]{1,0:T(1,128)}', space=vmem, size = 0x9000, scoped, tag = 'internal scratch']
  #allocation2 [shape = 'f32[64,384]{1,0:T(8,128)}', space=vmem, size = 0x18000, scoped, tag = 'scratch operand']
  %s0 = inlined_call_operand.vmem [shape: f32[64,32], index: 0, kind: input, shape index: {}]
  %s1 = inlined_call_operand.vmem [shape: f32[32,384], index: 1, kind: input, shape index: {}]
  %s2 = inlined_call_operand.hbm [shape: f32[128,384], index: 2, kind: input, shape index: {}]
  %s3 = inlined_call_operand.hbm [shape: f32[1,384], index: 3, kind: input, shape index: {}]
  %s4 = inlined_call_operand.vmem [shape: f32[1,384], index: 4, kind: input, shape index: {}]
  %s5 = inlined_call_operand.hbm [shape: f32[8,128], index: 5, kind: output, shape index: {}]
  %s6 = sld [smem:[#allocation0]]
  $region42: #{tpu_custom_call.1} parent=0
    _
  %s8 = ssub.s32 1, %s6
  %s9 = scalar_select 0, %s8, %s6
  $region1: #{tpu_custom_call.1} parent=0
    #allocation3 [shape = 'u8[196608]{0}', space=vmem, size = 0x30000, scoped, tag = 'input window, operand 2, single buffered']
    #allocation4 [shape = 's32[1]{0}', space=sflag, size = 0x4, scoped, tag = 'scoped memory for tpu_custom_call.1']
    #allocation5 [shape = 's32[1]{0}', space=sflag, size = 0x4, scoped, tag = 'scoped memory for tpu_custom_call.1']
    #allocation6 [shape = 'u8[1536]{0}', space=vmem, size = 0x800, scoped, tag = 'input window, operand 3, single buffered']
    #allocation7 [shape = 's32[1]{0}', space=sflag, size = 0x4, scoped, tag = 'scoped memory for tpu_custom_call.1']
    #allocation8 [shape = 'u8[4096]{0}', space=vmem, size = 0x1000, scoped, tag = 'output window, operand 0, single buffered']
    %10 = vsyncpa [#allocation4], 0
    %11 = vsyncpa [#allocation7], 0
    %12 = vsyncpa [#allocation5], 0
    // Predicated region
    $region2: #{tpu_custom_call.1} parent=1 // pred_check
      _
    $region3: #{tpu_custom_call.1} parent=1 // pred_check_branch
      %14 = sbr.rel (0) target = $region5
    $region4: #{tpu_custom_call.1} parent=1 // pred_region
      _
    $region5: #{tpu_custom_call.1} parent=1 // pred_fallthru
      _
    // Predicated region
    $region6: #{tpu_custom_call.1} parent=1 // pred_check
      _
    $region7: #{tpu_custom_call.1} parent=1 // pred_check_branch
      %16 = sbr.rel (0) target = $region9
    $region8: #{tpu_custom_call.1} parent=1 // pred_region
      _
    $region9: #{tpu_custom_call.1} parent=1 // pred_fallthru
      _
    // Predicated region
    $region10: #{tpu_custom_call.1} parent=1 // pred_check
      _
    $region11: #{tpu_custom_call.1} parent=1 // pred_check_branch
      %18 = sbr.rel (0) target = $region13
    $region12: #{tpu_custom_call.1} parent=1 // pred_region
      %20 = vsyncadd [#allocation4], 0
      %s21 = sshll.u32 %s2, 4
      %s22 = int_to_ptr.hbm [resolvable:$true] %s21
      %s23 = sshll.u32 [#allocation3], 4
      %s24 = int_to_ptr.vmem [resolvable:$true] %s23
      %29 = dma.hbm_to_vmem [thread:$0]  %s22, 6144, %s24, [#allocation4], 384, 384, 24
    $region13: #{tpu_custom_call.1} parent=1 // pred_fallthru
      _
    // Predicated region
    $region14: #{tpu_custom_call.1} parent=1 // pred_check
      _
    $region15: #{tpu_custom_call.1} parent=1 // pred_check_branch
      %31 = sbr.rel (0) target = $region17
    $region16: #{tpu_custom_call.1} parent=1 // pred_region
      %33 = vsyncadd [#allocation7], 0
      %s35 = sshll.u32 %s3, 4
      %s36 = int_to_ptr.hbm [resolvable:$true] %s35
      %s37 = sshll.u32 [#allocation6], 4
      %s38 = int_to_ptr.vmem [resolvable:$true] %s37
      %40 = dma.hbm_to_vmem [thread:$0]  %s36, 48, %s38, [#allocation7]
    $region17: #{tpu_custom_call.1} parent=1 // pred_fallthru
      _
    // Predicated region
    $region18: #{tpu_custom_call.1} parent=1 // pred_check
      _
    $region19: #{tpu_custom_call.1} parent=1 // pred_check_branch
      %42 = sbr.rel (0) target = $region21
    $region20: #{tpu_custom_call.1} parent=1 // pred_region
      _
    $region21: #{tpu_custom_call.1} parent=1 // pred_fallthru
      _
    // Predicated region
    $region22: #{tpu_custom_call.1} parent=1 // pred_check
      _
    $region23: #{tpu_custom_call.1} parent=1 // pred_check_branch
      %44 = sbr.rel (0) target = $region25
    $region24: #{tpu_custom_call.1} parent=1 // pred_region
      %46 = dma.done [#allocation4], 6144
    $region25: #{tpu_custom_call.1} parent=1 // pred_fallthru
      _
    // Predicated region
    $region26: #{tpu_custom_call.1} parent=1 // pred_check
      _
    $region27: #{tpu_custom_call.1} parent=1 // pred_check_branch
      %48 = sbr.rel (0) target = $region29
    $region28: #{tpu_custom_call.1} parent=1 // pred_region
      %50 = dma.done [#allocation7], 48
    $region29: #{tpu_custom_call.1} parent=1 // pred_fallthru
      _
    %p51 = scmp.eq.s32.totalorder 0, 0
    // Predicated region
    $region30: #{tpu_custom_call.1} parent=1 // pred_check
      %p52 = pneg %p51
    $region31: #{tpu_custom_call.1} parent=1 // pred_check_branch
      %54 = sbr.rel (%p52) target = $region33
    $region32: #{tpu_custom_call.1} parent=1 // pred_region
      %55 = vst [vmem:[#allocation8] sm:$0xff] 0.0
    $region33: #{tpu_custom_call.1} parent=1 // pred_fallthru
      _
    %v56 = vld [vmem:[%s0] sm:$0xff]
    %v57 = vld [vmem:[%s0 + $0x8] sm:$0xff]
    %v58 = vld [vmem:[%s0 + $0x10] sm:$0xff]
    %v59 = vld [vmem:[%s0 + $0x18] sm:$0xff]
    %v60 = vld [vmem:[%s0 + $0x20] sm:$0xff]
    %v61 = vld [vmem:[%s0 + $0x28] sm:$0xff]
    %v62 = vld [vmem:[%s0 + $0x30] sm:$0xff]
    %v63 = vld [vmem:[%s0 + $0x38] sm:$0xff]
    %v64 = vld [vmem:[%s1] sm:$0xff]
    %v65 = vld [vmem:[%s1 + $0x8] sm:$0xff]
    %v66 = vld [vmem:[%s1 + $0x10] sm:$0xff]
    %v67 = vld [vmem:[%s1 + $0x18] sm:$0xff]
    %v68 = vld [vmem:[%s1 + $0x20] sm:$0xff]
    %v69 = vld [vmem:[%s1 + $0x28] sm:$0xff]
    %v70 = vld [vmem:[%s1 + $0x30] sm:$0xff]
    %v71 = vld [vmem:[%s1 + $0x38] sm:$0xff]
    %v72 = vld [vmem:[%s1 + $0x40] sm:$0xff]
    %v73 = vld [vmem:[%s1 + $0x48] sm:$0xff]
    %v74 = vld [vmem:[%s1 + $0x50] sm:$0xff]
    %v75 = vld [vmem:[%s1 + $0x58] sm:$0xff]
    %v76 = vld [vmem:[#allocation6] sm:$0x7]
    %v78 = vperm.slane %v76, 0
    %v79 = vperm.slane %v76, 1
    %v80 = vperm.slane %v76, 2
    %vm84 = vcmask 261120
    %v86 = vsel %vm84, %v56, 0
    %v89 = vsel %vm84, %v57, 0
    %v92 = vsel %vm84, %v58, 0
    %v95 = vsel %vm84, %v59, 0
    %v98 = vsel %vm84, %v60, 0
    %v101 = vsel %vm84, %v61, 0
    %v104 = vsel %vm84, %v62, 0
    %v107 = vsel %vm84, %v63, 0
    %109 = vmatpush.msra.mxu0 0.0
    %110 = vmatpush.msra.mxu0 0.0
    %111 = vmatpush.msra.mxu0 0.0
    %112 = vmatpush.msra.mxu0 0.0
    %113 = vmatpush.msra.mxu0 0.0
    %114 = vmatpush.msra.mxu0 0.0
    %115 = vmatpush.msra.mxu0 0.0
    %116 = vmatpush.msra.mxu0 0.0
    %117 = vmatpush.msra.mxu0 0.0
    %118 = vmatpush.msra.mxu0 0.0
    %119 = vmatpush.msra.mxu0 0.0
    %120 = vmatpush.msra.mxu0 0.0
    %121 = vmatpush.msra.mxu0 %v73
    %122 = vmatpush.msra.mxu0 %v70
    %123 = vmatpush.msra.mxu0 %v67
    %124 = vmatpush.msra.mxu0 %v64
    %125 = vmatmul.f32.gmra.mxu0 %v86
    %v126 = vpop.f32.mrf.mxu0
    %v127 = vadd.f32 %v78, %v126
    %128 = vmatmul.f32.gmra.mxu0 %v89
    %v129 = vpop.f32.mrf.mxu0
    %v130 = vadd.f32 %v78, %v129
    %131 = vmatmul.f32.gmra.mxu0 %v92
    %v132 = vpop.f32.mrf.mxu0
    %v133 = vadd.f32 %v78, %v132
    %134 = vmatmul.f32.gmra.mxu0 %v95
    %v135 = vpop.f32.mrf.mxu0
    %v136 = vadd.f32 %v78, %v135
    %137 = vmatmul.f32.gmra.mxu0 %v98
    %v138 = vpop.f32.mrf.mxu0
    %v139 = vadd.f32 %v78, %v138
    %140 = vmatmul.f32.gmra.mxu0 %v101
    %v141 = vpop.f32.mrf.mxu0
    %v142 = vadd.f32 %v78, %v141
    %143 = vmatmul.f32.gmra.mxu0 %v104
    %v144 = vpop.f32.mrf.mxu0
    %v145 = vadd.f32 %v78, %v144
    %146 = vmatmul.f32.gmra.mxu0 %v107
    %v147 = vpop.f32.mrf.mxu0
    %v148 = vadd.f32 %v78, %v147
    %149 = vdwg.mxu0
    %150 = vmatpush.msra.mxu0 0.0
    %151 = vmatpush.msra.mxu0 0.0
    %152 = vmatpush.msra.mxu0 0.0
    %153 = vmatpush.msra.mxu0 0.0
    %154 = vmatpush.msra.mxu0 0.0
    %155 = vmatpush.msra.mxu0 0.0
    %156 = vmatpush.msra.mxu0 0.0
    %157 = vmatpush.msra.mxu0 0.0
    %158 = vmatpush.msra.mxu0 0.0
    %159 = vmatpush.msra.mxu0 0.0
    %160 = vmatpush.msra.mxu0 0.0
    %161 = vmatpush.msra.mxu0 0.0
    %162 = vmatpush.msra.mxu0 %v74
    %163 = vmatpush.msra.mxu0 %v71
    %164 = vmatpush.msra.mxu0 %v68
    %165 = vmatpush.msra.mxu0 %v65
    %166 = vmatmul.f32.gmra.mxu0 %v86
    %v167 = vpop.f32.mrf.mxu0
    %v168 = vadd.f32 %v79, %v167
    %169 = vmatmul.f32.gmra.mxu0 %v89
    %v170 = vpop.f32.mrf.mxu0
    %v171 = vadd.f32 %v79, %v170
    %172 = vmatmul.f32.gmra.mxu0 %v92
    %v173 = vpop.f32.mrf.mxu0
    %v174 = vadd.f32 %v79, %v173
    %175 = vmatmul.f32.gmra.mxu0 %v95
    %v176 = vpop.f32.mrf.mxu0
    %v177 = vadd.f32 %v79, %v176
    %178 = vmatmul.f32.gmra.mxu0 %v98
    %v179 = vpop.f32.mrf.mxu0
    %v180 = vadd.f32 %v79, %v179
    %181 = vmatmul.f32.gmra.mxu0 %v101
    %v182 = vpop.f32.mrf.mxu0
    %v183 = vadd.f32 %v79, %v182
    %184 = vmatmul.f32.gmra.mxu0 %v104
    %v185 = vpop.f32.mrf.mxu0
    %v186 = vadd.f32 %v79, %v185
    %187 = vmatmul.f32.gmra.mxu0 %v107
    %v188 = vpop.f32.mrf.mxu0
    %v189 = vadd.f32 %v79, %v188
    %190 = vdwg.mxu0
    %191 = vmatpush.msra.mxu0 0.0
    %192 = vmatpush.msra.mxu0 0.0
    %193 = vmatpush.msra.mxu0 0.0
    %194 = vmatpush.msra.mxu0 0.0
    %195 = vmatpush.msra.mxu0 0.0
    %196 = vmatpush.msra.mxu0 0.0
    %197 = vmatpush.msra.mxu0 0.0
    %198 = vmatpush.msra.mxu0 0.0
    %199 = vmatpush.msra.mxu0 0.0
    %200 = vmatpush.msra.mxu0 0.0
    %201 = vmatpush.msra.mxu0 0.0
    %202 = vmatpush.msra.mxu0 0.0
    %203 = vmatpush.msra.mxu0 %v75
    %204 = vmatpush.msra.mxu0 %v72
    %205 = vmatpush.msra.mxu0 %v69
    %206 = vmatpush.msra.mxu0 %v66
    %207 = vmatmul.f32.gmra.mxu0 %v86
    %v208 = vpop.f32.mrf.mxu0
    %v209 = vadd.f32 %v80, %v208
    %210 = vmatmul.f32.gmra.mxu0 %v89
    %v211 = vpop.f32.mrf.mxu0
    %v212 = vadd.f32 %v80, %v211
    %213 = vmatmul.f32.gmra.mxu0 %v92
    %v214 = vpop.f32.mrf.mxu0
    %v215 = vadd.f32 %v80, %v214
    %216 = vmatmul.f32.gmra.mxu0 %v95
    %v217 = vpop.f32.mrf.mxu0
    %v218 = vadd.f32 %v80, %v217
    %219 = vmatmul.f32.gmra.mxu0 %v98
    %v220 = vpop.f32.mrf.mxu0
    %v221 = vadd.f32 %v80, %v220
    %222 = vmatmul.f32.gmra.mxu0 %v101
    %v223 = vpop.f32.mrf.mxu0
    %v224 = vadd.f32 %v80, %v223
    %225 = vmatmul.f32.gmra.mxu0 %v104
    %v226 = vpop.f32.mrf.mxu0
    %v227 = vadd.f32 %v80, %v226
    %228 = vmatmul.f32.gmra.mxu0 %v107
    %v229 = vpop.f32.mrf.mxu0
    %v230 = vadd.f32 %v80, %v229
    %231 = vdwg.mxu0
    %232 = vst [vmem:[#allocation2] sm:$0xff] %v127
    %233 = vst [vmem:[#allocation2 + $0x8] sm:$0xff] %v168
    %234 = vst [vmem:[#allocation2 + $0x10] sm:$0xff] %v209
    %235 = vst [vmem:[#allocation2 + $0x18] sm:$0xff] %v130
    %236 = vst [vmem:[#allocation2 + $0x20] sm:$0xff] %v171
    %237 = vst [vmem:[#allocation2 + $0x28] sm:$0xff] %v212
    %238 = vst [vmem:[#allocation2 + $0x30] sm:$0xff] %v133
    %239 = vst [vmem:[#allocation2 + $0x38] sm:$0xff] %v174
    %240 = vst [vmem:[#allocation2 + $0x40] sm:$0xff] %v215
    %241 = vst [vmem:[#allocation2 + $0x48] sm:$0xff] %v136
    %242 = vst [vmem:[#allocation2 + $0x50] sm:$0xff] %v177
    %243 = vst [vmem:[#allocation2 + $0x58] sm:$0xff] %v218
    %244 = vst [vmem:[#allocation2 + $0x60] sm:$0xff] %v139
    %245 = vst [vmem:[#allocation2 + $0x68] sm:$0xff] %v180
    %246 = vst [vmem:[#allocation2 + $0x70] sm:$0xff] %v221
    %247 = vst [vmem:[#allocation2 + $0x78] sm:$0xff] %v142
    %248 = vst [vmem:[#allocation2 + $0x80] sm:$0xff] %v183
    %249 = vst [vmem:[#allocation2 + $0x88] sm:$0xff] %v224
    %250 = vst [vmem:[#allocation2 + $0x90] sm:$0xff] %v145
    %251 = vst [vmem:[#allocation2 + $0x98] sm:$0xff] %v186
    %252 = vst [vmem:[#allocation2 + $0xa0] sm:$0xff] %v227
    %253 = vst [vmem:[#allocation2 + $0xa8] sm:$0xff] %v148
    %254 = vst [vmem:[#allocation2 + $0xb0] sm:$0xff] %v189
    %255 = vst [vmem:[#allocation2 + $0xb8] sm:$0xff] %v230
    %v256 = vld [vmem:[#allocation3] sm:$0xff]
    %v257 = vld [vmem:[#allocation3 + $0x8] sm:$0xff]
    %v258 = vld [vmem:[#allocation3 + $0x10] sm:$0xff]
    %v259 = vld [vmem:[#allocation3 + $0x18] sm:$0xff]
    %v260 = vld [vmem:[#allocation3 + $0x20] sm:$0xff]
    %v261 = vld [vmem:[#allocation3 + $0x28] sm:$0xff]
    %v262 = vld [vmem:[#allocation3 + $0x30] sm:$0xff]
    %v263 = vld [vmem:[#allocation3 + $0x38] sm:$0xff]
    %v264 = vld [vmem:[#allocation3 + $0x40] sm:$0xff]
    %v265 = vld [vmem:[#allocation3 + $0x48] sm:$0xff]
    %v266 = vld [vmem:[#allocation3 + $0x50] sm:$0xff]
    %v267 = vld [vmem:[#allocation3 + $0x58] sm:$0xff]
    %v268 = vld [vmem:[#allocation3 + $0x60] sm:$0xff]
    %v269 = vld [vmem:[#allocation3 + $0x68] sm:$0xff]
    %v270 = vld [vmem:[#allocation3 + $0x70] sm:$0xff]
    %v271 = vld [vmem:[#allocation3 + $0x78] sm:$0xff]
    %v272 = vld [vmem:[#allocation3 + $0x80] sm:$0xff]
    %v273 = vld [vmem:[#allocation3 + $0x88] sm:$0xff]
    %v274 = vld [vmem:[#allocation3 + $0x90] sm:$0xff]
    %v275 = vld [vmem:[#allocation3 + $0x98] sm:$0xff]
    %v276 = vld [vmem:[#allocation3 + $0xa0] sm:$0xff]
    %v277 = vld [vmem:[#allocation3 + $0xa8] sm:$0xff]
    %v278 = vld [vmem:[#allocation3 + $0xb0] sm:$0xff]
    %v279 = vld [vmem:[#allocation3 + $0xb8] sm:$0xff]
    %v280 = vld [vmem:[#allocation3 + $0xc0] sm:$0xff]
    %v281 = vld [vmem:[#allocation3 + $0xc8] sm:$0xff]
    %v282 = vld [vmem:[#allocation3 + $0xd0] sm:$0xff]
    %v283 = vld [vmem:[#allocation3 + $0xd8] sm:$0xff]
    %v284 = vld [vmem:[#allocation3 + $0xe0] sm:$0xff]
    %v285 = vld [vmem:[#allocation3 + $0xe8] sm:$0xff]
    %v286 = vld [vmem:[#allocation3 + $0xf0] sm:$0xff]
    %v287 = vld [vmem:[#allocation3 + $0xf8] sm:$0xff]
    %v288 = vld [vmem:[#allocation3 + $0x100] sm:$0xff]
    %v289 = vld [vmem:[#allocation3 + $0x108] sm:$0xff]
    %v290 = vld [vmem:[#allocation3 + $0x110] sm:$0xff]
    %v291 = vld [vmem:[#allocation3 + $0x118] sm:$0xff]
    %v292 = vld [vmem:[#allocation3 + $0x120] sm:$0xff]
    %v293 = vld [vmem:[#allocation3 + $0x128] sm:$0xff]
    %v294 = vld [vmem:[#allocation3 + $0x130] sm:$0xff]
    %v295 = vld [vmem:[#allocation3 + $0x138] sm:$0xff]
    %v296 = vld [vmem:[#allocation3 + $0x140] sm:$0xff]
    %v297 = vld [vmem:[#allocation3 + $0x148] sm:$0xff]
    %v298 = vld [vmem:[#allocation3 + $0x150] sm:$0xff]
    %v299 = vld [vmem:[#allocation3 + $0x158] sm:$0xff]
    %v300 = vld [vmem:[#allocation3 + $0x160] sm:$0xff]
    %v301 = vld [vmem:[#allocation3 + $0x168] sm:$0xff]
    %v302 = vld [vmem:[#allocation3 + $0x170] sm:$0xff]
    %v303 = vld [vmem:[#allocation3 + $0x178] sm:$0xff]
    %v304 = vld [vmem:[%s4] sm:$0x7]
    %v305 = vld [vmem:[#allocation8] sm:$0xff]
    %s306 = smul.u32 0, 8
    %v307 = vld [vmem:[#allocation2] sm:$0xff]
    %v308 = vld [vmem:[#allocation2 + $0x8] sm:$0xff]
    %v309 = vld [vmem:[#allocation2 + $0x10] sm:$0xff]
    %v311 = vperm.slane %v304, 0
    %v312 = vperm.slane %v304, 1
    %v313 = vperm.slane %v304, 2
    %317 = vmatpush.msra.mxu0 %v301
    %318 = vmatpush.msra.mxu0 %v298
    %319 = vmatpush.msra.mxu0 %v295
    %320 = vmatpush.msra.mxu0 %v292
    %321 = vmatpush.msra.mxu0 %v289
    %322 = vmatpush.msra.mxu0 %v286
    %323 = vmatpush.msra.mxu0 %v283
    %324 = vmatpush.msra.mxu0 %v280
    %325 = vmatpush.msra.mxu0 %v277
    %326 = vmatpush.msra.mxu0 %v274
    %327 = vmatpush.msra.mxu0 %v271
    %328 = vmatpush.msra.mxu0 %v268
    %329 = vmatpush.msra.mxu0 %v265
    %330 = vmatpush.msra.mxu0 %v262
    %331 = vmatpush.msra.mxu0 %v259
    %332 = vmatpush.msra.mxu0 %v256
    %333 = vmatmul.f32.gmra.mxu0 %v305
    %v334 = vpop.f32.mrf.mxu0
    %v335 = vadd.f32 %v311, %v334
    %336 = vdwg.mxu0
    %337 = vmatpush.msra.mxu0 %v302
    %338 = vmatpush.msra.mxu0 %v299
    %339 = vmatpush.msra.mxu0 %v296
    %340 = vmatpush.msra.mxu0 %v293
    %341 = vmatpush.msra.mxu0 %v290
    %342 = vmatpush.msra.mxu0 %v287
    %343 = vmatpush.msra.mxu0 %v284
    %344 = vmatpush.msra.mxu0 %v281
    %345 = vmatpush.msra.mxu0 %v278
    %346 = vmatpush.msra.mxu0 %v275
    %347 = vmatpush.msra.mxu0 %v272
    %348 = vmatpush.msra.mxu0 %v269
    %349 = vmatpush.msra.mxu0 %v266
    %350 = vmatpush.msra.mxu0 %v263
    %351 = vmatpush.msra.mxu0 %v260
    %352 = vmatpush.msra.mxu0 %v257
    %353 = vmatmul.f32.gmra.mxu0 %v305
    %v354 = vpop.f32.mrf.mxu0
    %v355 = vadd.f32 %v312, %v354
    %356 = vdwg.mxu0
    %357 = vmatpush.msra.mxu0 %v303
    %358 = vmatpush.msra.mxu0 %v300
    %359 = vmatpush.msra.mxu0 %v297
    %360 = vmatpush.msra.mxu0 %v294
    %361 = vmatpush.msra.mxu0 %v291
    %362 = vmatpush.msra.mxu0 %v288
    %363 = vmatpush.msra.mxu0 %v285
    %364 = vmatpush.msra.mxu0 %v282
    %365 = vmatpush.msra.mxu0 %v279
    %366 = vmatpush.msra.mxu0 %v276
    %367 = vmatpush.msra.mxu0 %v273
    %368 = vmatpush.msra.mxu0 %v270
    %369 = vmatpush.msra.mxu0 %v267
    %370 = vmatpush.msra.mxu0 %v264
    %371 = vmatpush.msra.mxu0 %v261
    %372 = vmatpush.msra.mxu0 %v258
    %373 = vmatmul.f32.gmra.mxu0 %v305
    %v374 = vpop.f32.mrf.mxu0
    %v375 = vadd.f32 %v313, %v374
    %376 = vdwg.mxu0
    %v377 = vadd.f32 %v307, %v335
    %v378 = vxor.u32 %v377, 2147483648
    %v379 = vmul.f32 %v378, 1.442695
    %v380 = vpow.pop %v379
    %v381 = vadd.f32 %v380, 1.0
    %v382 = vrcp.pop %v381
    %v383 = vmul.f32 %v381, %v382
    %v384 = vsub.f32 1.0, %v383
    %v385 = vmul.f32 %v382, %v384
    %v386 = vadd.f32 %v382, %v385
    %vm387 = vweird.f32 %v381
    %vm388 = vweird.f32 %v382
    %vm389 = vmor %vm387, %vm388
    %v390 = vsel %vm389, %v382, %v386
    %v391 = vand.u32 2147483647, %v381
    %vm392 = vcmp.eq.f32.partialorder %v391, 8.507059e+37
    %v393 = vand.u32 %v381, 2147483648
    %v394 = vor.u32 1.1754944e-38, %v393
    %v395 = vsel %vm392, %v394, %v390
    %v396 = vmul.f32 1.0, %v395
    %v397 = vadd.f32 %v308, %v355
    %v398 = vxor.u32 %v397, 2147483648
    %v399 = vmul.f32 %v398, 1.442695
    %v400 = vpow.pop %v399
    %v401 = vadd.f32 %v400, 1.0
    %v402 = vrcp.pop %v401
    %v403 = vmul.f32 %v401, %v402
    %v404 = vsub.f32 1.0, %v403
    %v405 = vmul.f32 %v402, %v404
    %v406 = vadd.f32 %v402, %v405
    %vm407 = vweird.f32 %v401
    %vm408 = vweird.f32 %v402
    %vm409 = vmor %vm407, %vm408
    %v410 = vsel %vm409, %v402, %v406
    %v411 = vand.u32 2147483647, %v401
    %vm412 = vcmp.eq.f32.partialorder %v411, 8.507059e+37
    %v413 = vand.u32 %v401, 2147483648
    %v414 = vor.u32 1.1754944e-38, %v413
    %v415 = vsel %vm412, %v414, %v410
    %v416 = vmul.f32 1.0, %v415
    %v417 = vmul.f32 %v396, %v375
    %v418 = vadd.f32 %v309, %v417
    %v419 = vtanh.pop %v418
    %v420 = vsub.f32 1.0, %v416
    %v421 = vmul.f32 %v420, %v419
    %v422 = vmul.f32 %v416, %v305
    %v423 = vadd.f32 %v421, %v422
    %p424 = scmp.lt.s32.totalorder %s306, 8
    %s425 = scalar_select %p424, 1, 0
    %v426 = vstv %s425
    %vm427 = vcmp.eq.s32.totalorder %v426, 1
    %v428 = vsel %vm427, %v423, %v305
    %s429 = sadd.s32 %s306, 1
    %v430 = vld [vmem:[#allocation2 + $0x18] sm:$0xff]
    %v431 = vld [vmem:[#allocation2 + $0x20] sm:$0xff]
    %v432 = vld [vmem:[#allocation2 + $0x28] sm:$0xff]
    %433 = vmatpush.msra.mxu0 %v301
    %434 = vmatpush.msra.mxu0 %v298
    %435 = vmatpush.msra.mxu0 %v295
    %436 = vmatpush.msra.mxu0 %v292
    %437 = vmatpush.msra.mxu0 %v289
    %438 = vmatpush.msra.mxu0 %v286
    %439 = vmatpush.msra.mxu0 %v283
    %440 = vmatpush.msra.mxu0 %v280
    %441 = vmatpush.msra.mxu0 %v277
    %442 = vmatpush.msra.mxu0 %v274
    %443 = vmatpush.msra.mxu0 %v271
    %444 = vmatpush.msra.mxu0 %v268
    %445 = vmatpush.msra.mxu0 %v265
    %446 = vmatpush.msra.mxu0 %v262
    %447 = vmatpush.msra.mxu0 %v259
    %448 = vmatpush.msra.mxu0 %v256
    %449 = vmatmul.f32.gmra.mxu0 %v428
    %v450 = vpop.f32.mrf.mxu0
    %v451 = vadd.f32 %v311, %v450
    %452 = vdwg.mxu0
    %453 = vmatpush.msra.mxu0 %v302
    %454 = vmatpush.msra.mxu0 %v299
    %455 = vmatpush.msra.mxu0 %v296
    %456 = vmatpush.msra.mxu0 %v293
    %457 = vmatpush.msra.mxu0 %v290
    %458 = vmatpush.msra.mxu0 %v287
    %459 = vmatpush.msra.mxu0 %v284
    %460 = vmatpush.msra.mxu0 %v281
    %461 = vmatpush.msra.mxu0 %v278
    %462 = vmatpush.msra.mxu0 %v275
    %463 = vmatpush.msra.mxu0 %v272
    %464 = vmatpush.msra.mxu0 %v269
    %465 = vmatpush.msra.mxu0 %v266
    %466 = vmatpush.msra.mxu0 %v263
    %467 = vmatpush.msra.mxu0 %v260
    %468 = vmatpush.msra.mxu0 %v257
    %469 = vmatmul.f32.gmra.mxu0 %v428
    %v470 = vpop.f32.mrf.mxu0
    %v471 = vadd.f32 %v312, %v470
    %472 = vdwg.mxu0
    %473 = vmatpush.msra.mxu0 %v303
    %474 = vmatpush.msra.mxu0 %v300
    %475 = vmatpush.msra.mxu0 %v297
    %476 = vmatpush.msra.mxu0 %v294
    %477 = vmatpush.msra.mxu0 %v291
    %478 = vmatpush.msra.mxu0 %v288
    %479 = vmatpush.msra.mxu0 %v285
    %480 = vmatpush.msra.mxu0 %v282
    %481 = vmatpush.msra.mxu0 %v279
    %482 = vmatpush.msra.mxu0 %v276
    %483 = vmatpush.msra.mxu0 %v273
    %484 = vmatpush.msra.mxu0 %v270
    %485 = vmatpush.msra.mxu0 %v267
    %486 = vmatpush.msra.mxu0 %v264
    %487 = vmatpush.msra.mxu0 %v261
    %488 = vmatpush.msra.mxu0 %v258
    %489 = vmatmul.f32.gmra.mxu0 %v428
    %v490 = vpop.f32.mrf.mxu0
    %v491 = vadd.f32 %v313, %v490
    %492 = vdwg.mxu0
    %v493 = vadd.f32 %v430, %v451
    %v494 = vxor.u32 %v493, 2147483648
    %v495 = vmul.f32 %v494, 1.442695
    %v496 = vpow.pop %v495
    %v497 = vadd.f32 %v496, 1.0
    %v498 = vrcp.pop %v497
    %v499 = vmul.f32 %v497, %v498
    %v500 = vsub.f32 1.0, %v499
    %v501 = vmul.f32 %v498, %v500
    %v502 = vadd.f32 %v498, %v501
    %vm503 = vweird.f32 %v497
    %vm504 = vweird.f32 %v498
    %vm505 = vmor %vm503, %vm504
    %v506 = vsel %vm505, %v498, %v502
    %v507 = vand.u32 2147483647, %v497
    %vm508 = vcmp.eq.f32.partialorder %v507, 8.507059e+37
    %v509 = vand.u32 %v497, 2147483648
    %v510 = vor.u32 1.1754944e-38, %v509
    %v511 = vsel %vm508, %v510, %v506
    %v512 = vmul.f32 1.0, %v511
    %v513 = vadd.f32 %v431, %v471
    %v514 = vxor.u32 %v513, 2147483648
    %v515 = vmul.f32 %v514, 1.442695
    %v516 = vpow.pop %v515
    %v517 = vadd.f32 %v516, 1.0
    %v518 = vrcp.pop %v517
    %v519 = vmul.f32 %v517, %v518
    %v520 = vsub.f32 1.0, %v519
    %v521 = vmul.f32 %v518, %v520
    %v522 = vadd.f32 %v518, %v521
    %vm523 = vweird.f32 %v517
    %vm524 = vweird.f32 %v518
    %vm525 = vmor %vm523, %vm524
    %v526 = vsel %vm525, %v518, %v522
    %v527 = vand.u32 2147483647, %v517
    %vm528 = vcmp.eq.f32.partialorder %v527, 8.507059e+37
    %v529 = vand.u32 %v517, 2147483648
    %v530 = vor.u32 1.1754944e-38, %v529
    %v531 = vsel %vm528, %v530, %v526
    %v532 = vmul.f32 1.0, %v531
    %v533 = vmul.f32 %v512, %v491
    %v534 = vadd.f32 %v432, %v533
    %v535 = vtanh.pop %v534
    %v536 = vsub.f32 1.0, %v532
    %v537 = vmul.f32 %v536, %v535
    %v538 = vmul.f32 %v532, %v428
    %v539 = vadd.f32 %v537, %v538
    %p540 = scmp.lt.s32.totalorder %s429, 8
    %s541 = scalar_select %p540, 1, 0
    %v542 = vstv %s541
    %vm543 = vcmp.eq.s32.totalorder %v542, 1
    %v544 = vsel %vm543, %v539, %v428
    %s545 = sadd.s32 %s306, 2
    %v546 = vld [vmem:[#allocation2 + $0x30] sm:$0xff]
    %v547 = vld [vmem:[#allocation2 + $0x38] sm:$0xff]
    %v548 = vld [vmem:[#allocation2 + $0x40] sm:$0xff]
    %549 = vmatpush.msra.mxu0 %v301
    %550 = vmatpush.msra.mxu0 %v298
    %551 = vmatpush.msra.mxu0 %v295
    %552 = vmatpush.msra.mxu0 %v292
    %553 = vmatpush.msra.mxu0 %v289
    %554 = vmatpush.msra.mxu0 %v286
    %555 = vmatpush.msra.mxu0 %v283
    %556 = vmatpush.msra.mxu0 %v280
    %557 = vmatpush.msra.mxu0 %v277
    %558 = vmatpush.msra.mxu0 %v274
    %559 = vmatpush.msra.mxu0 %v271
    %560 = vmatpush.msra.mxu0 %v268
    %561 = vmatpush.msra.mxu0 %v265
    %562 = vmatpush.msra.mxu0 %v262
    %563 = vmatpush.msra.mxu0 %v259
    %564 = vmatpush.msra.mxu0 %v256
    %565 = vmatmul.f32.gmra.mxu0 %v544
    %v566 = vpop.f32.mrf.mxu0
    %v567 = vadd.f32 %v311, %v566
    %568 = vdwg.mxu0
    %569 = vmatpush.msra.mxu0 %v302
    %570 = vmatpush.msra.mxu0 %v299
    %571 = vmatpush.msra.mxu0 %v296
    %572 = vmatpush.msra.mxu0 %v293
    %573 = vmatpush.msra.mxu0 %v290
    %574 = vmatpush.msra.mxu0 %v287
    %575 = vmatpush.msra.mxu0 %v284
    %576 = vmatpush.msra.mxu0 %v281
    %577 = vmatpush.msra.mxu0 %v278
    %578 = vmatpush.msra.mxu0 %v275
    %579 = vmatpush.msra.mxu0 %v272
    %580 = vmatpush.msra.mxu0 %v269
    %581 = vmatpush.msra.mxu0 %v266
    %582 = vmatpush.msra.mxu0 %v263
    %583 = vmatpush.msra.mxu0 %v260
    %584 = vmatpush.msra.mxu0 %v257
    %585 = vmatmul.f32.gmra.mxu0 %v544
    %v586 = vpop.f32.mrf.mxu0
    %v587 = vadd.f32 %v312, %v586
    %588 = vdwg.mxu0
    %589 = vmatpush.msra.mxu0 %v303
    %590 = vmatpush.msra.mxu0 %v300
    %591 = vmatpush.msra.mxu0 %v297
    %592 = vmatpush.msra.mxu0 %v294
    %593 = vmatpush.msra.mxu0 %v291
    %594 = vmatpush.msra.mxu0 %v288
    %595 = vmatpush.msra.mxu0 %v285
    %596 = vmatpush.msra.mxu0 %v282
    %597 = vmatpush.msra.mxu0 %v279
    %598 = vmatpush.msra.mxu0 %v276
    %599 = vmatpush.msra.mxu0 %v273
    %600 = vmatpush.msra.mxu0 %v270
    %601 = vmatpush.msra.mxu0 %v267
    %602 = vmatpush.msra.mxu0 %v264
    %603 = vmatpush.msra.mxu0 %v261
    %604 = vmatpush.msra.mxu0 %v258
    %605 = vmatmul.f32.gmra.mxu0 %v544
    %v606 = vpop.f32.mrf.mxu0
    %v607 = vadd.f32 %v313, %v606
    %608 = vdwg.mxu0
    %v609 = vadd.f32 %v546, %v567
    %v610 = vxor.u32 %v609, 2147483648
    %v611 = vmul.f32 %v610, 1.442695
    %v612 = vpow.pop %v611
    %v613 = vadd.f32 %v612, 1.0
    %v614 = vrcp.pop %v613
    %v615 = vmul.f32 %v613, %v614
    %v616 = vsub.f32 1.0, %v615
    %v617 = vmul.f32 %v614, %v616
    %v618 = vadd.f32 %v614, %v617
    %vm619 = vweird.f32 %v613
    %vm620 = vweird.f32 %v614
    %vm621 = vmor %vm619, %vm620
    %v622 = vsel %vm621, %v614, %v618
    %v623 = vand.u32 2147483647, %v613
    %vm624 = vcmp.eq.f32.partialorder %v623, 8.507059e+37
    %v625 = vand.u32 %v613, 2147483648
    %v626 = vor.u32 1.1754944e-38, %v625
    %v627 = vsel %vm624, %v626, %v622
    %v628 = vmul.f32 1.0, %v627
    %v629 = vadd.f32 %v547, %v587
    %v630 = vxor.u32 %v629, 2147483648
    %v631 = vmul.f32 %v630, 1.442695
    %v632 = vpow.pop %v631
    %v633 = vadd.f32 %v632, 1.0
    %v634 = vrcp.pop %v633
    %v635 = vmul.f32 %v633, %v634
    %v636 = vsub.f32 1.0, %v635
    %v637 = vmul.f32 %v634, %v636
    %v638 = vadd.f32 %v634, %v637
    %vm639 = vweird.f32 %v633
    %vm640 = vweird.f32 %v634
    %vm641 = vmor %vm639, %vm640
    %v642 = vsel %vm641, %v634, %v638
    %v643 = vand.u32 2147483647, %v633
    %vm644 = vcmp.eq.f32.partialorder %v643, 8.507059e+37
    %v645 = vand.u32 %v633, 2147483648
    %v646 = vor.u32 1.1754944e-38, %v645
    %v647 = vsel %vm644, %v646, %v642
    %v648 = vmul.f32 1.0, %v647
    %v649 = vmul.f32 %v628, %v607
    %v650 = vadd.f32 %v548, %v649
    %v651 = vtanh.pop %v650
    %v652 = vsub.f32 1.0, %v648
    %v653 = vmul.f32 %v652, %v651
    %v654 = vmul.f32 %v648, %v544
    %v655 = vadd.f32 %v653, %v654
    %p656 = scmp.lt.s32.totalorder %s545, 8
    %s657 = scalar_select %p656, 1, 0
    %v658 = vstv %s657
    %vm659 = vcmp.eq.s32.totalorder %v658, 1
    %v660 = vsel %vm659, %v655, %v544
    %s661 = sadd.s32 %s306, 3
    %v662 = vld [vmem:[#allocation2 + $0x48] sm:$0xff]
    %v663 = vld [vmem:[#allocation2 + $0x50] sm:$0xff]
    %v664 = vld [vmem:[#allocation2 + $0x58] sm:$0xff]
    %665 = vmatpush.msra.mxu0 %v301
    %666 = vmatpush.msra.mxu0 %v298
    %667 = vmatpush.msra.mxu0 %v295
    %668 = vmatpush.msra.mxu0 %v292
    %669 = vmatpush.msra.mxu0 %v289
    %670 = vmatpush.msra.mxu0 %v286
    %671 = vmatpush.msra.mxu0 %v283
    %672 = vmatpush.msra.mxu0 %v280
    %673 = vmatpush.msra.mxu0 %v277
    %674 = vmatpush.msra.mxu0 %v274
    %675 = vmatpush.msra.mxu0 %v271
    %676 = vmatpush.msra.mxu0 %v268
    %677 = vmatpush.msra.mxu0 %v265
    %678 = vmatpush.msra.mxu0 %v262
    %679 = vmatpush.msra.mxu0 %v259
    %680 = vmatpush.msra.mxu0 %v256
    %681 = vmatmul.f32.gmra.mxu0 %v660
    %v682 = vpop.f32.mrf.mxu0
    %v683 = vadd.f32 %v311, %v682
    %684 = vdwg.mxu0
    %685 = vmatpush.msra.mxu0 %v302
    %686 = vmatpush.msra.mxu0 %v299
    %687 = vmatpush.msra.mxu0 %v296
    %688 = vmatpush.msra.mxu0 %v293
    %689 = vmatpush.msra.mxu0 %v290
    %690 = vmatpush.msra.mxu0 %v287
    %691 = vmatpush.msra.mxu0 %v284
    %692 = vmatpush.msra.mxu0 %v281
    %693 = vmatpush.msra.mxu0 %v278
    %694 = vmatpush.msra.mxu0 %v275
    %695 = vmatpush.msra.mxu0 %v272
    %696 = vmatpush.msra.mxu0 %v269
    %697 = vmatpush.msra.mxu0 %v266
    %698 = vmatpush.msra.mxu0 %v263
    %699 = vmatpush.msra.mxu0 %v260
    %700 = vmatpush.msra.mxu0 %v257
    %701 = vmatmul.f32.gmra.mxu0 %v660
    %v702 = vpop.f32.mrf.mxu0
    %v703 = vadd.f32 %v312, %v702
    %704 = vdwg.mxu0
    %705 = vmatpush.msra.mxu0 %v303
    %706 = vmatpush.msra.mxu0 %v300
    %707 = vmatpush.msra.mxu0 %v297
    %708 = vmatpush.msra.mxu0 %v294
    %709 = vmatpush.msra.mxu0 %v291
    %710 = vmatpush.msra.mxu0 %v288
    %711 = vmatpush.msra.mxu0 %v285
    %712 = vmatpush.msra.mxu0 %v282
    %713 = vmatpush.msra.mxu0 %v279
    %714 = vmatpush.msra.mxu0 %v276
    %715 = vmatpush.msra.mxu0 %v273
    %716 = vmatpush.msra.mxu0 %v270
    %717 = vmatpush.msra.mxu0 %v267
    %718 = vmatpush.msra.mxu0 %v264
    %719 = vmatpush.msra.mxu0 %v261
    %720 = vmatpush.msra.mxu0 %v258
    %721 = vmatmul.f32.gmra.mxu0 %v660
    %v722 = vpop.f32.mrf.mxu0
    %v723 = vadd.f32 %v313, %v722
    %724 = vdwg.mxu0
    %v725 = vadd.f32 %v662, %v683
    %v726 = vxor.u32 %v725, 2147483648
    %v727 = vmul.f32 %v726, 1.442695
    %v728 = vpow.pop %v727
    %v729 = vadd.f32 %v728, 1.0
    %v730 = vrcp.pop %v729
    %v731 = vmul.f32 %v729, %v730
    %v732 = vsub.f32 1.0, %v731
    %v733 = vmul.f32 %v730, %v732
    %v734 = vadd.f32 %v730, %v733
    %vm735 = vweird.f32 %v729
    %vm736 = vweird.f32 %v730
    %vm737 = vmor %vm735, %vm736
    %v738 = vsel %vm737, %v730, %v734
    %v739 = vand.u32 2147483647, %v729
    %vm740 = vcmp.eq.f32.partialorder %v739, 8.507059e+37
    %v741 = vand.u32 %v729, 2147483648
    %v742 = vor.u32 1.1754944e-38, %v741
    %v743 = vsel %vm740, %v742, %v738
    %v744 = vmul.f32 1.0, %v743
    %v745 = vadd.f32 %v663, %v703
    %v746 = vxor.u32 %v745, 2147483648
    %v747 = vmul.f32 %v746, 1.442695
    %v748 = vpow.pop %v747
    %v749 = vadd.f32 %v748, 1.0
    %v750 = vrcp.pop %v749
    %v751 = vmul.f32 %v749, %v750
    %v752 = vsub.f32 1.0, %v751
    %v753 = vmul.f32 %v750, %v752
    %v754 = vadd.f32 %v750, %v753
    %vm755 = vweird.f32 %v749
    %vm756 = vweird.f32 %v750
    %vm757 = vmor %vm755, %vm756
    %v758 = vsel %vm757, %v750, %v754
    %v759 = vand.u32 2147483647, %v749
    %vm760 = vcmp.eq.f32.partialorder %v759, 8.507059e+37
    %v761 = vand.u32 %v749, 2147483648
    %v762 = vor.u32 1.1754944e-38, %v761
    %v763 = vsel %vm760, %v762, %v758
    %v764 = vmul.f32 1.0, %v763
    %v765 = vmul.f32 %v744, %v723
    %v766 = vadd.f32 %v664, %v765
    %v767 = vtanh.pop %v766
    %v768 = vsub.f32 1.0, %v764
    %v769 = vmul.f32 %v768, %v767
    %v770 = vmul.f32 %v764, %v660
    %v771 = vadd.f32 %v769, %v770
    %p772 = scmp.lt.s32.totalorder %s661, 8
    %s773 = scalar_select %p772, 1, 0
    %v774 = vstv %s773
    %vm775 = vcmp.eq.s32.totalorder %v774, 1
    %v776 = vsel %vm775, %v771, %v660
    %s777 = sadd.s32 %s306, 4
    %v778 = vld [vmem:[#allocation2 + $0x60] sm:$0xff]
    %v779 = vld [vmem:[#allocation2 + $0x68] sm:$0xff]
    %v780 = vld [vmem:[#allocation2 + $0x70] sm:$0xff]
    %781 = vmatpush.msra.mxu0 %v301
    %782 = vmatpush.msra.mxu0 %v298
    %783 = vmatpush.msra.mxu0 %v295
    %784 = vmatpush.msra.mxu0 %v292
    %785 = vmatpush.msra.mxu0 %v289
    %786 = vmatpush.msra.mxu0 %v286
    %787 = vmatpush.msra.mxu0 %v283
    %788 = vmatpush.msra.mxu0 %v280
    %789 = vmatpush.msra.mxu0 %v277
    %790 = vmatpush.msra.mxu0 %v274
    %791 = vmatpush.msra.mxu0 %v271
    %792 = vmatpush.msra.mxu0 %v268
    %793 = vmatpush.msra.mxu0 %v265
    %794 = vmatpush.msra.mxu0 %v262
    %795 = vmatpush.msra.mxu0 %v259
    %796 = vmatpush.msra.mxu0 %v256
    %797 = vmatmul.f32.gmra.mxu0 %v776
    %v798 = vpop.f32.mrf.mxu0
    %v799 = vadd.f32 %v311, %v798
    %800 = vdwg.mxu0
    %801 = vmatpush.msra.mxu0 %v302
    %802 = vmatpush.msra.mxu0 %v299
    %803 = vmatpush.msra.mxu0 %v296
    %804 = vmatpush.msra.mxu0 %v293
    %805 = vmatpush.msra.mxu0 %v290
    %806 = vmatpush.msra.mxu0 %v287
    %807 = vmatpush.msra.mxu0 %v284
    %808 = vmatpush.msra.mxu0 %v281
    %809 = vmatpush.msra.mxu0 %v278
    %810 = vmatpush.msra.mxu0 %v275
    %811 = vmatpush.msra.mxu0 %v272
    %812 = vmatpush.msra.mxu0 %v269
    %813 = vmatpush.msra.mxu0 %v266
    %814 = vmatpush.msra.mxu0 %v263
    %815 = vmatpush.msra.mxu0 %v260
    %816 = vmatpush.msra.mxu0 %v257
    %817 = vmatmul.f32.gmra.mxu0 %v776
    %v818 = vpop.f32.mrf.mxu0
    %v819 = vadd.f32 %v312, %v818
    %820 = vdwg.mxu0
    %821 = vmatpush.msra.mxu0 %v303
    %822 = vmatpush.msra.mxu0 %v300
    %823 = vmatpush.msra.mxu0 %v297
    %824 = vmatpush.msra.mxu0 %v294
    %825 = vmatpush.msra.mxu0 %v291
    %826 = vmatpush.msra.mxu0 %v288
    %827 = vmatpush.msra.mxu0 %v285
    %828 = vmatpush.msra.mxu0 %v282
    %829 = vmatpush.msra.mxu0 %v279
    %830 = vmatpush.msra.mxu0 %v276
    %831 = vmatpush.msra.mxu0 %v273
    %832 = vmatpush.msra.mxu0 %v270
    %833 = vmatpush.msra.mxu0 %v267
    %834 = vmatpush.msra.mxu0 %v264
    %835 = vmatpush.msra.mxu0 %v261
    %836 = vmatpush.msra.mxu0 %v258
    %837 = vmatmul.f32.gmra.mxu0 %v776
    %v838 = vpop.f32.mrf.mxu0
    %v839 = vadd.f32 %v313, %v838
    %840 = vdwg.mxu0
    %v841 = vadd.f32 %v778, %v799
    %v842 = vxor.u32 %v841, 2147483648
    %v843 = vmul.f32 %v842, 1.442695
    %v844 = vpow.pop %v843
    %v845 = vadd.f32 %v844, 1.0
    %v846 = vrcp.pop %v845
    %v847 = vmul.f32 %v845, %v846
    %v848 = vsub.f32 1.0, %v847
    %v849 = vmul.f32 %v846, %v848
    %v850 = vadd.f32 %v846, %v849
    %vm851 = vweird.f32 %v845
    %vm852 = vweird.f32 %v846
    %vm853 = vmor %vm851, %vm852
    %v854 = vsel %vm853, %v846, %v850
    %v855 = vand.u32 2147483647, %v845
    %vm856 = vcmp.eq.f32.partialorder %v855, 8.507059e+37
    %v857 = vand.u32 %v845, 2147483648
    %v858 = vor.u32 1.1754944e-38, %v857
    %v859 = vsel %vm856, %v858, %v854
    %v860 = vmul.f32 1.0, %v859
    %v861 = vadd.f32 %v779, %v819
    %v862 = vxor.u32 %v861, 2147483648
    %v863 = vmul.f32 %v862, 1.442695
    %v864 = vpow.pop %v863
    %v865 = vadd.f32 %v864, 1.0
    %v866 = vrcp.pop %v865
    %v867 = vmul.f32 %v865, %v866
    %v868 = vsub.f32 1.0, %v867
    %v869 = vmul.f32 %v866, %v868
    %v870 = vadd.f32 %v866, %v869
    %vm871 = vweird.f32 %v865
    %vm872 = vweird.f32 %v866
    %vm873 = vmor %vm871, %vm872
    %v874 = vsel %vm873, %v866, %v870
    %v875 = vand.u32 2147483647, %v865
    %vm876 = vcmp.eq.f32.partialorder %v875, 8.507059e+37
    %v877 = vand.u32 %v865, 2147483648
    %v878 = vor.u32 1.1754944e-38, %v877
    %v879 = vsel %vm876, %v878, %v874
    %v880 = vmul.f32 1.0, %v879
    %v881 = vmul.f32 %v860, %v839
    %v882 = vadd.f32 %v780, %v881
    %v883 = vtanh.pop %v882
    %v884 = vsub.f32 1.0, %v880
    %v885 = vmul.f32 %v884, %v883
    %v886 = vmul.f32 %v880, %v776
    %v887 = vadd.f32 %v885, %v886
    %p888 = scmp.lt.s32.totalorder %s777, 8
    %s889 = scalar_select %p888, 1, 0
    %v890 = vstv %s889
    %vm891 = vcmp.eq.s32.totalorder %v890, 1
    %v892 = vsel %vm891, %v887, %v776
    %s893 = sadd.s32 %s306, 5
    %v894 = vld [vmem:[#allocation2 + $0x78] sm:$0xff]
    %v895 = vld [vmem:[#allocation2 + $0x80] sm:$0xff]
    %v896 = vld [vmem:[#allocation2 + $0x88] sm:$0xff]
    %897 = vmatpush.msra.mxu0 %v301
    %898 = vmatpush.msra.mxu0 %v298
    %899 = vmatpush.msra.mxu0 %v295
    %900 = vmatpush.msra.mxu0 %v292
    %901 = vmatpush.msra.mxu0 %v289
    %902 = vmatpush.msra.mxu0 %v286
    %903 = vmatpush.msra.mxu0 %v283
    %904 = vmatpush.msra.mxu0 %v280
    %905 = vmatpush.msra.mxu0 %v277
    %906 = vmatpush.msra.mxu0 %v274
    %907 = vmatpush.msra.mxu0 %v271
    %908 = vmatpush.msra.mxu0 %v268
    %909 = vmatpush.msra.mxu0 %v265
    %910 = vmatpush.msra.mxu0 %v262
    %911 = vmatpush.msra.mxu0 %v259
    %912 = vmatpush.msra.mxu0 %v256
    %913 = vmatmul.f32.gmra.mxu0 %v892
    %v914 = vpop.f32.mrf.mxu0
    %v915 = vadd.f32 %v311, %v914
    %916 = vdwg.mxu0
    %917 = vmatpush.msra.mxu0 %v302
    %918 = vmatpush.msra.mxu0 %v299
    %919 = vmatpush.msra.mxu0 %v296
    %920 = vmatpush.msra.mxu0 %v293
    %921 = vmatpush.msra.mxu0 %v290
    %922 = vmatpush.msra.mxu0 %v287
    %923 = vmatpush.msra.mxu0 %v284
    %924 = vmatpush.msra.mxu0 %v281
    %925 = vmatpush.msra.mxu0 %v278
    %926 = vmatpush.msra.mxu0 %v275
    %927 = vmatpush.msra.mxu0 %v272
    %928 = vmatpush.msra.mxu0 %v269
    %929 = vmatpush.msra.mxu0 %v266
    %930 = vmatpush.msra.mxu0 %v263
    %931 = vmatpush.msra.mxu0 %v260
    %932 = vmatpush.msra.mxu0 %v257
    %933 = vmatmul.f32.gmra.mxu0 %v892
    %v934 = vpop.f32.mrf.mxu0
    %v935 = vadd.f32 %v312, %v934
    %936 = vdwg.mxu0
    %937 = vmatpush.msra.mxu0 %v303
    %938 = vmatpush.msra.mxu0 %v300
    %939 = vmatpush.msra.mxu0 %v297
    %940 = vmatpush.msra.mxu0 %v294
    %941 = vmatpush.msra.mxu0 %v291
    %942 = vmatpush.msra.mxu0 %v288
    %943 = vmatpush.msra.mxu0 %v285
    %944 = vmatpush.msra.mxu0 %v282
    %945 = vmatpush.msra.mxu0 %v279
    %946 = vmatpush.msra.mxu0 %v276
    %947 = vmatpush.msra.mxu0 %v273
    %948 = vmatpush.msra.mxu0 %v270
    %949 = vmatpush.msra.mxu0 %v267
    %950 = vmatpush.msra.mxu0 %v264
    %951 = vmatpush.msra.mxu0 %v261
    %952 = vmatpush.msra.mxu0 %v258
    %953 = vmatmul.f32.gmra.mxu0 %v892
    %v954 = vpop.f32.mrf.mxu0
    %v955 = vadd.f32 %v313, %v954
    %956 = vdwg.mxu0
    %v957 = vadd.f32 %v894, %v915
    %v958 = vxor.u32 %v957, 2147483648
    %v959 = vmul.f32 %v958, 1.442695
    %v960 = vpow.pop %v959
    %v961 = vadd.f32 %v960, 1.0
    %v962 = vrcp.pop %v961
    %v963 = vmul.f32 %v961, %v962
    %v964 = vsub.f32 1.0, %v963
    %v965 = vmul.f32 %v962, %v964
    %v966 = vadd.f32 %v962, %v965
    %vm967 = vweird.f32 %v961
    %vm968 = vweird.f32 %v962
    %vm969 = vmor %vm967, %vm968
    %v970 = vsel %vm969, %v962, %v966
    %v971 = vand.u32 2147483647, %v961
    %vm972 = vcmp.eq.f32.partialorder %v971, 8.507059e+37
    %v973 = vand.u32 %v961, 2147483648
    %v974 = vor.u32 1.1754944e-38, %v973
    %v975 = vsel %vm972, %v974, %v970
    %v976 = vmul.f32 1.0, %v975
    %v977 = vadd.f32 %v895, %v935
    %v978 = vxor.u32 %v977, 2147483648
    %v979 = vmul.f32 %v978, 1.442695
    %v980 = vpow.pop %v979
    %v981 = vadd.f32 %v980, 1.0
    %v982 = vrcp.pop %v981
    %v983 = vmul.f32 %v981, %v982
    %v984 = vsub.f32 1.0, %v983
    %v985 = vmul.f32 %v982, %v984
    %v986 = vadd.f32 %v982, %v985
    %vm987 = vweird.f32 %v981
    %vm988 = vweird.f32 %v982
    %vm989 = vmor %vm987, %vm988
    %v990 = vsel %vm989, %v982, %v986
    %v991 = vand.u32 2147483647, %v981
    %vm992 = vcmp.eq.f32.partialorder %v991, 8.507059e+37
    %v993 = vand.u32 %v981, 2147483648
    %v994 = vor.u32 1.1754944e-38, %v993
    %v995 = vsel %vm992, %v994, %v990
    %v996 = vmul.f32 1.0, %v995
    %v997 = vmul.f32 %v976, %v955
    %v998 = vadd.f32 %v896, %v997
    %v999 = vtanh.pop %v998
    %v1000 = vsub.f32 1.0, %v996
    %v1001 = vmul.f32 %v1000, %v999
    %v1002 = vmul.f32 %v996, %v892
    %v1003 = vadd.f32 %v1001, %v1002
    %p1004 = scmp.lt.s32.totalorder %s893, 8
    %s1005 = scalar_select %p1004, 1, 0
    %v1006 = vstv %s1005
    %vm1007 = vcmp.eq.s32.totalorder %v1006, 1
    %v1008 = vsel %vm1007, %v1003, %v892
    %s1009 = sadd.s32 %s306, 6
    %v1010 = vld [vmem:[#allocation2 + $0x90] sm:$0xff]
    %v1011 = vld [vmem:[#allocation2 + $0x98] sm:$0xff]
    %v1012 = vld [vmem:[#allocation2 + $0xa0] sm:$0xff]
    %1013 = vmatpush.msra.mxu0 %v301
    %1014 = vmatpush.msra.mxu0 %v298
    %1015 = vmatpush.msra.mxu0 %v295
    %1016 = vmatpush.msra.mxu0 %v292
    %1017 = vmatpush.msra.mxu0 %v289
    %1018 = vmatpush.msra.mxu0 %v286
    %1019 = vmatpush.msra.mxu0 %v283
    %1020 = vmatpush.msra.mxu0 %v280
    %1021 = vmatpush.msra.mxu0 %v277
    %1022 = vmatpush.msra.mxu0 %v274
    %1023 = vmatpush.msra.mxu0 %v271
    %1024 = vmatpush.msra.mxu0 %v268
    %1025 = vmatpush.msra.mxu0 %v265
    %1026 = vmatpush.msra.mxu0 %v262
    %1027 = vmatpush.msra.mxu0 %v259
    %1028 = vmatpush.msra.mxu0 %v256
    %1029 = vmatmul.f32.gmra.mxu0 %v1008
    %v1030 = vpop.f32.mrf.mxu0
    %v1031 = vadd.f32 %v311, %v1030
    %1032 = vdwg.mxu0
    %1033 = vmatpush.msra.mxu0 %v302
    %1034 = vmatpush.msra.mxu0 %v299
    %1035 = vmatpush.msra.mxu0 %v296
    %1036 = vmatpush.msra.mxu0 %v293
    %1037 = vmatpush.msra.mxu0 %v290
    %1038 = vmatpush.msra.mxu0 %v287
    %1039 = vmatpush.msra.mxu0 %v284
    %1040 = vmatpush.msra.mxu0 %v281
    %1041 = vmatpush.msra.mxu0 %v278
    %1042 = vmatpush.msra.mxu0 %v275
    %1043 = vmatpush.msra.mxu0 %v272
    %1044 = vmatpush.msra.mxu0 %v269
    %1045 = vmatpush.msra.mxu0 %v266
    %1046 = vmatpush.msra.mxu0 %v263
    %1047 = vmatpush.msra.mxu0 %v260
    %1048 = vmatpush.msra.mxu0 %v257
    %1049 = vmatmul.f32.gmra.mxu0 %v1008
    %v1050 = vpop.f32.mrf.mxu0
    %v1051 = vadd.f32 %v312, %v1050
    %1052 = vdwg.mxu0
    %1053 = vmatpush.msra.mxu0 %v303
    %1054 = vmatpush.msra.mxu0 %v300
    %1055 = vmatpush.msra.mxu0 %v297
    %1056 = vmatpush.msra.mxu0 %v294
    %1057 = vmatpush.msra.mxu0 %v291
    %1058 = vmatpush.msra.mxu0 %v288
    %1059 = vmatpush.msra.mxu0 %v285
    %1060 = vmatpush.msra.mxu0 %v282
    %1061 = vmatpush.msra.mxu0 %v279
    %1062 = vmatpush.msra.mxu0 %v276
    %1063 = vmatpush.msra.mxu0 %v273
    %1064 = vmatpush.msra.mxu0 %v270
    %1065 = vmatpush.msra.mxu0 %v267
    %1066 = vmatpush.msra.mxu0 %v264
    %1067 = vmatpush.msra.mxu0 %v261
    %1068 = vmatpush.msra.mxu0 %v258
    %1069 = vmatmul.f32.gmra.mxu0 %v1008
    %v1070 = vpop.f32.mrf.mxu0
    %v1071 = vadd.f32 %v313, %v1070
    %1072 = vdwg.mxu0
    %v1073 = vadd.f32 %v1010, %v1031
    %v1074 = vxor.u32 %v1073, 2147483648
    %v1075 = vmul.f32 %v1074, 1.442695
    %v1076 = vpow.pop %v1075
    %v1077 = vadd.f32 %v1076, 1.0
    %v1078 = vrcp.pop %v1077
    %v1079 = vmul.f32 %v1077, %v1078
    %v1080 = vsub.f32 1.0, %v1079
    %v1081 = vmul.f32 %v1078, %v1080
    %v1082 = vadd.f32 %v1078, %v1081
    %vm1083 = vweird.f32 %v1077
    %vm1084 = vweird.f32 %v1078
    %vm1085 = vmor %vm1083, %vm1084
    %v1086 = vsel %vm1085, %v1078, %v1082
    %v1087 = vand.u32 2147483647, %v1077
    %vm1088 = vcmp.eq.f32.partialorder %v1087, 8.507059e+37
    %v1089 = vand.u32 %v1077, 2147483648
    %v1090 = vor.u32 1.1754944e-38, %v1089
    %v1091 = vsel %vm1088, %v1090, %v1086
    %v1092 = vmul.f32 1.0, %v1091
    %v1093 = vadd.f32 %v1011, %v1051
    %v1094 = vxor.u32 %v1093, 2147483648
    %v1095 = vmul.f32 %v1094, 1.442695
    %v1096 = vpow.pop %v1095
    %v1097 = vadd.f32 %v1096, 1.0
    %v1098 = vrcp.pop %v1097
    %v1099 = vmul.f32 %v1097, %v1098
    %v1100 = vsub.f32 1.0, %v1099
    %v1101 = vmul.f32 %v1098, %v1100
    %v1102 = vadd.f32 %v1098, %v1101
    %vm1103 = vweird.f32 %v1097
    %vm1104 = vweird.f32 %v1098
    %vm1105 = vmor %vm1103, %vm1104
    %v1106 = vsel %vm1105, %v1098, %v1102
    %v1107 = vand.u32 2147483647, %v1097
    %vm1108 = vcmp.eq.f32.partialorder %v1107, 8.507059e+37
    %v1109 = vand.u32 %v1097, 2147483648
    %v1110 = vor.u32 1.1754944e-38, %v1109
    %v1111 = vsel %vm1108, %v1110, %v1106
    %v1112 = vmul.f32 1.0, %v1111
    %v1113 = vmul.f32 %v1092, %v1071
    %v1114 = vadd.f32 %v1012, %v1113
    %v1115 = vtanh.pop %v1114
    %v1116 = vsub.f32 1.0, %v1112
    %v1117 = vmul.f32 %v1116, %v1115
    %v1118 = vmul.f32 %v1112, %v1008
    %v1119 = vadd.f32 %v1117, %v1118
    %p1120 = scmp.lt.s32.totalorder %s1009, 8
    %s1121 = scalar_select %p1120, 1, 0
    %v1122 = vstv %s1121
    %vm1123 = vcmp.eq.s32.totalorder %v1122, 1
    %v1124 = vsel %vm1123, %v1119, %v1008
    %s1125 = sadd.s32 %s306, 7
    %v1126 = vld [vmem:[#allocation2 + $0xa8] sm:$0xff]
    %v1127 = vld [vmem:[#allocation2 + $0xb0] sm:$0xff]
    %v1128 = vld [vmem:[#allocation2 + $0xb8] sm:$0xff]
    %1129 = vmatpush.msra.mxu0 %v301
    %1130 = vmatpush.msra.mxu0 %v298
    %1131 = vmatpush.msra.mxu0 %v295
    %1132 = vmatpush.msra.mxu0 %v292
    %1133 = vmatpush.msra.mxu0 %v289
    %1134 = vmatpush.msra.mxu0 %v286
    %1135 = vmatpush.msra.mxu0 %v283
    %1136 = vmatpush.msra.mxu0 %v280
    %1137 = vmatpush.msra.mxu0 %v277
    %1138 = vmatpush.msra.mxu0 %v274
    %1139 = vmatpush.msra.mxu0 %v271
    %1140 = vmatpush.msra.mxu0 %v268
    %1141 = vmatpush.msra.mxu0 %v265
    %1142 = vmatpush.msra.mxu0 %v262
    %1143 = vmatpush.msra.mxu0 %v259
    %1144 = vmatpush.msra.mxu0 %v256
    %1145 = vmatmul.f32.gmra.mxu0 %v1124
    %v1146 = vpop.f32.mrf.mxu0
    %v1147 = vadd.f32 %v311, %v1146
    %1148 = vdwg.mxu0
    %1149 = vmatpush.msra.mxu0 %v302
    %1150 = vmatpush.msra.mxu0 %v299
    %1151 = vmatpush.msra.mxu0 %v296
    %1152 = vmatpush.msra.mxu0 %v293
    %1153 = vmatpush.msra.mxu0 %v290
    %1154 = vmatpush.msra.mxu0 %v287
    %1155 = vmatpush.msra.mxu0 %v284
    %1156 = vmatpush.msra.mxu0 %v281
    %1157 = vmatpush.msra.mxu0 %v278
    %1158 = vmatpush.msra.mxu0 %v275
    %1159 = vmatpush.msra.mxu0 %v272
    %1160 = vmatpush.msra.mxu0 %v269
    %1161 = vmatpush.msra.mxu0 %v266
    %1162 = vmatpush.msra.mxu0 %v263
    %1163 = vmatpush.msra.mxu0 %v260
    %1164 = vmatpush.msra.mxu0 %v257
    %1165 = vmatmul.f32.gmra.mxu0 %v1124
    %v1166 = vpop.f32.mrf.mxu0
    %v1167 = vadd.f32 %v312, %v1166
    %1168 = vdwg.mxu0
    %1169 = vmatpush.msra.mxu0 %v303
    %1170 = vmatpush.msra.mxu0 %v300
    %1171 = vmatpush.msra.mxu0 %v297
    %1172 = vmatpush.msra.mxu0 %v294
    %1173 = vmatpush.msra.mxu0 %v291
    %1174 = vmatpush.msra.mxu0 %v288
    %1175 = vmatpush.msra.mxu0 %v285
    %1176 = vmatpush.msra.mxu0 %v282
    %1177 = vmatpush.msra.mxu0 %v279
    %1178 = vmatpush.msra.mxu0 %v276
    %1179 = vmatpush.msra.mxu0 %v273
    %1180 = vmatpush.msra.mxu0 %v270
    %1181 = vmatpush.msra.mxu0 %v267
    %1182 = vmatpush.msra.mxu0 %v264
    %1183 = vmatpush.msra.mxu0 %v261
    %1184 = vmatpush.msra.mxu0 %v258
    %1185 = vmatmul.f32.gmra.mxu0 %v1124
    %v1186 = vpop.f32.mrf.mxu0
    %v1187 = vadd.f32 %v313, %v1186
    %1188 = vdwg.mxu0
    %v1189 = vadd.f32 %v1126, %v1147
    %v1190 = vxor.u32 %v1189, 2147483648
    %v1191 = vmul.f32 %v1190, 1.442695
    %v1192 = vpow.pop %v1191
    %v1193 = vadd.f32 %v1192, 1.0
    %v1194 = vrcp.pop %v1193
    %v1195 = vmul.f32 %v1193, %v1194
    %v1196 = vsub.f32 1.0, %v1195
    %v1197 = vmul.f32 %v1194, %v1196
    %v1198 = vadd.f32 %v1194, %v1197
    %vm1199 = vweird.f32 %v1193
    %vm1200 = vweird.f32 %v1194
    %vm1201 = vmor %vm1199, %vm1200
    %v1202 = vsel %vm1201, %v1194, %v1198
    %v1203 = vand.u32 2147483647, %v1193
    %vm1204 = vcmp.eq.f32.partialorder %v1203, 8.507059e+37
    %v1205 = vand.u32 %v1193, 2147483648
    %v1206 = vor.u32 1.1754944e-38, %v1205
    %v1207 = vsel %vm1204, %v1206, %v1202
    %v1208 = vmul.f32 1.0, %v1207
    %v1209 = vadd.f32 %v1127, %v1167
    %v1210 = vxor.u32 %v1209, 2147483648
    %v1211 = vmul.f32 %v1210, 1.442695
    %v1212 = vpow.pop %v1211
    %v1213 = vadd.f32 %v1212, 1.0
    %v1214 = vrcp.pop %v1213
    %v1215 = vmul.f32 %v1213, %v1214
    %v1216 = vsub.f32 1.0, %v1215
    %v1217 = vmul.f32 %v1214, %v1216
    %v1218 = vadd.f32 %v1214, %v1217
    %vm1219 = vweird.f32 %v1213
    %vm1220 = vweird.f32 %v1214
    %vm1221 = vmor %vm1219, %vm1220
    %v1222 = vsel %vm1221, %v1214, %v1218
    %v1223 = vand.u32 2147483647, %v1213
    %vm1224 = vcmp.eq.f32.partialorder %v1223, 8.507059e+37
    %v1225 = vand.u32 %v1213, 2147483648
    %v1226 = vor.u32 1.1754944e-38, %v1225
    %v1227 = vsel %vm1224, %v1226, %v1222
    %v1228 = vmul.f32 1.0, %v1227
    %v1229 = vmul.f32 %v1208, %v1187
    %v1230 = vadd.f32 %v1128, %v1229
    %v1231 = vtanh.pop %v1230
    %v1232 = vsub.f32 1.0, %v1228
    %v1233 = vmul.f32 %v1232, %v1231
    %v1234 = vmul.f32 %v1228, %v1124
    %v1235 = vadd.f32 %v1233, %v1234
    %p1236 = scmp.lt.s32.totalorder %s1125, 8
    %s1237 = scalar_select %p1236, 1, 0
    %v1238 = vstv %s1237
    %vm1239 = vcmp.eq.s32.totalorder %v1238, 1
    %v1240 = vsel %vm1239, %v1235, %v1124
    %1241 = vst [vmem:[#allocation8] sm:$0xff] %v1240
    // Predicated region
    $region34: #{tpu_custom_call.1} parent=1 // pred_check
      _
    $region35: #{tpu_custom_call.1} parent=1 // pred_check_branch
      %1243 = sbr.rel (0) target = $region37
    $region36: #{tpu_custom_call.1} parent=1 // pred_region
      %1245 = vsyncadd [#allocation5], 0
      %s1247 = sshll.u32 [#allocation8], 4
      %s1248 = int_to_ptr.vmem [resolvable:$true] %s1247
      %s1249 = sshll.u32 %s5, 4
      %s1250 = int_to_ptr.hbm [resolvable:$true] %s1249
      %1252 = dma.vmem_to_hbm [thread:$0]  %s1248, 128, %s1250, [#allocation5]
    $region37: #{tpu_custom_call.1} parent=1 // pred_fallthru
      _
    // Predicated region
    $region38: #{tpu_custom_call.1} parent=1 // pred_check
      _
    $region39: #{tpu_custom_call.1} parent=1 // pred_check_branch
      %1254 = sbr.rel (0) target = $region41
    $region40: #{tpu_custom_call.1} parent=1 // pred_region
      %1256 = dma.done [#allocation5], 128
    $region41: #{tpu_custom_call.1} parent=1 // pred_fallthru
      _
    %1257 = vsyncpa [#allocation4], 1
    %1258 = vsyncpa [#allocation7], 1
    %1259 = vsyncpa [#allocation5], 1

</llo_original>
